<compile_context>
chip_gen: v7x
topology: tpu7x:2x2x1
jax: 0.10.0
libtpu: 0.0.40
codegen_flags: <defaults>
</compile_context>

<pallas_src>
import jax
import jax.numpy as jnp
from jax.experimental import pallas as pl
from jax.experimental.pallas import tpu as pltpu  # noqa: F401 (TPU backend)

M, K, N = 120, 256, 256  # fixed by the module's parameter shapes


def linear_kernel(x_ref, y_ref, w_ref, o_ref):
    # Single MXU matmul over the whole (resident) operands, then the constant
    # all-ones bias and the residual add on the VPU, all in VMEM.
    out_y = jnp.dot(
        y_ref[...],
        w_ref[...],
        preferred_element_type=jnp.float32,
        precision=jax.lax.Precision.HIGHEST,
    )
    o_ref[...] = (x_ref[...] + out_y + jnp.float32(1.0)).astype(o_ref.dtype)


def linear_forward(x, y, weight):
    """x: [M, N], y: [M, K], weight: [K, N]. The module's bias (ones[M, N]) is
    folded into the kernel as a constant +1.0 (exact, since it is all-ones)."""
    flops = 2 * M * K * N
    bytes_accessed = (
        x.size * x.dtype.itemsize
        + y.size * y.dtype.itemsize
        + weight.size * weight.dtype.itemsize
        + M * N * 4  # output
    )
    return pl.pallas_call(
        linear_kernel,
        out_shape=jax.ShapeDtypeStruct((M, N), jnp.float32),
        # No grid: one invocation, full-extent blocks (shapes equal the full
        # array dims, so the (8,128) tiling constraint is trivially satisfied).
        in_specs=[
            pl.BlockSpec((M, N), lambda: (0, 0)),  # x
            pl.BlockSpec((M, K), lambda: (0, 0)),  # y
            pl.BlockSpec((K, N), lambda: (0, 0)),  # weight
        ],
        out_specs=pl.BlockSpec((M, N), lambda: (0, 0)),
        cost_estimate=pl.CostEstimate(
            flops=flops,
            transcendentals=0,
            bytes_accessed=bytes_accessed,
        ),
    )(x, y, weight)


if __name__ == "__main__":
    key = jax.random.PRNGKey(0)
    kx, ky = jax.random.split(key)

    # Deterministic parameters, as in the module's __init__.
    weight = jnp.ones((K, N), dtype=jnp.float32)

    # Example inputs consistent with forward(x, y).
    x = jax.random.normal(kx, (M, N), dtype=jnp.float32)
    y = jax.random.normal(ky, (M, K), dtype=jnp.float32)

    out = linear_forward(x, y, weight)
    out = jax.block_until_ready(out)

    # Reference check in plain JAX (full [120, 256] all-ones bias as in the module).
    ref = x + (
        jnp.dot(y, weight, precision=jax.lax.Precision.HIGHEST)
        + jnp.ones((M, N), dtype=jnp.float32)
    )
    assert out.shape == (M, N)
    assert jnp.allclose(out, ref, atol=1e-4, rtol=1e-4)

    print("KERNEL_OK")
</pallas_src>

<mosaic_0001>
module attributes {stable_mosaic.version = 11 : i64} {
  func.func @linear_kernel(%arg0: memref<120x256xf32, #tpu.memory_space<vmem>>, %arg1: memref<120x256xf32, #tpu.memory_space<vmem>>, %arg2: memref<256x256xf32, #tpu.memory_space<vmem>>, %arg3: memref<120x256xf32, #tpu.memory_space<vmem>>) attributes {dimension_semantics = [], scalar_prefetch = 0 : i64, scratch_operands = 0 : i64, tpu.core_type = #tpu.core_type<tc>} {
    %c0 = arith.constant 0 : index
    %c0_0 = arith.constant 0 : index
    %0 = vector.load %arg1[%c0, %c0_0] : memref<120x256xf32, #tpu.memory_space<vmem>>, vector<120x256xf32>
    %c0_1 = arith.constant 0 : index
    %c0_2 = arith.constant 0 : index
    %1 = vector.load %arg2[%c0_1, %c0_2] : memref<256x256xf32, #tpu.memory_space<vmem>>, vector<256x256xf32>
    %cst = arith.constant dense<0.000000e+00> : vector<120x256xf32>
    %2 = tpu.matmul %0, %1, %cst {dimension_numbers = #tpu.dot_dimension_numbers<[1], [0], [0], [1], [0, 0, 1, 1], [], []>, precision = #tpu.contract_precision<fp32>} : vector<120x256xf32>, vector<256x256xf32>, vector<120x256xf32> -> vector<120x256xf32>
    %c0_3 = arith.constant 0 : index
    %c0_4 = arith.constant 0 : index
    %3 = vector.load %arg0[%c0_3, %c0_4] : memref<120x256xf32, #tpu.memory_space<vmem>>, vector<120x256xf32>
    %4 = arith.addf %3, %2 : vector<120x256xf32>
    %cst_5 = arith.constant 1.000000e+00 : f32
    %5 = vector.broadcast %cst_5 : f32 to vector<120x256xf32>
    %6 = arith.addf %4, %5 : vector<120x256xf32>
    %c0_6 = arith.constant 0 : index
    %c0_7 = arith.constant 0 : index
    %7 = vector.load %arg3[%c0_6, %c0_7] : memref<120x256xf32, #tpu.memory_space<vmem>>, vector<120x256xf32>
    tpu.vector_store %arg3[%c0_6, %c0_7], %6 {strides = array<i32>} : memref<120x256xf32, #tpu.memory_space<vmem>>, vector<120x256xf32>,
    return
  }
}

</mosaic_0001>

<llo_original>
// kernel: tpu_custom_call.1
$region0: #{tpu_custom_call.1}
  #allocation0 [shape = 'u32[]', space=smem, size = 0x4, offset = 0x4, fixed_abs, tag = 'smem constant byte address 0x4 - core index']
  #allocation1 [shape = 'u32[144,128]{1,0:T(1,128)}', space=vmem, size = 0x12000, scoped, tag = 'internal scratch']
  %s0 = inlined_call_operand.hbm [shape: f32[120,256], index: 0, kind: input, shape index: {}]
  %s1 = inlined_call_operand.hbm [shape: f32[120,256], index: 1, kind: input, shape index: {}]
  %s2 = inlined_call_operand.hbm [shape: f32[256,256], index: 2, kind: input, shape index: {}]
  %s3 = inlined_call_operand.hbm [shape: f32[120,256], index: 3, kind: output, shape index: {}]
  %s4 = sld [smem:[#allocation0]]
  $region34: #{tpu_custom_call.1} parent=0
    _
  %s6 = ssub.s32 1, %s4
  %s7 = scalar_select 0, %s6, %s4
  $region1: #{tpu_custom_call.1} parent=0
    #allocation2 [shape = 'u8[122880]{0}', space=vmem, size = 0x1e000, scoped, tag = 'input window, operand 0, single buffered']
    #allocation3 [shape = 's32[1]{0}', space=sflag, size = 0x4, scoped, tag = 'scoped memory for tpu_custom_call.1']
    #allocation4 [shape = 's32[1]{0}', space=sflag, size = 0x4, scoped, tag = 'scoped memory for tpu_custom_call.1']
    #allocation5 [shape = 'u8[122880]{0}', space=vmem, size = 0x1e000, scoped, tag = 'input window, operand 1, single buffered']
    #allocation6 [shape = 's32[1]{0}', space=sflag, size = 0x4, scoped, tag = 'scoped memory for tpu_custom_call.1']
    #allocation7 [shape = 'u8[262144]{0}', space=vmem, size = 0x40000, scoped, tag = 'input window, operand 2, single buffered']
    #allocation8 [shape = 'u8[122880]{0}', space=vmem, size = 0x1e000, scoped, tag = 'output window, operand 0, single buffered']
    %8 = vsyncpa [#allocation3], 0
    %9 = vsyncpa [#allocation6], 0
    %10 = vsyncpa [#allocation4], 0
    // Predicated region
    $region2: #{tpu_custom_call.1} parent=1 // pred_check
      _
    $region3: #{tpu_custom_call.1} parent=1 // pred_check_branch
      %12 = sbr.rel (0) target = $region5
    $region4: #{tpu_custom_call.1} parent=1 // pred_region
      %s14 = ssub.s32 3840, 3840
      %15 = vsyncadd [#allocation3], %s14
      %s16 = sshll.u32 [#allocation2], 4
      %s17 = int_to_ptr.vmem [resolvable:$true] %s16
      %22 = dma.hbm_to_vmem [thread:$0]  %s0, 3840, %s17, [#allocation3], 256, 256, 16
    $region5: #{tpu_custom_call.1} parent=1 // pred_fallthru
      _
    // Predicated region
    $region6: #{tpu_custom_call.1} parent=1 // pred_check
      _
    $region7: #{tpu_custom_call.1} parent=1 // pred_check_branch
      %24 = sbr.rel (0) target = $region9
    $region8: #{tpu_custom_call.1} parent=1 // pred_region
      %s26 = ssub.s32 3840, 3840
      %27 = vsyncadd [#allocation6], %s26
      %s28 = sshll.u32 [#allocation5], 4
      %s29 = int_to_ptr.vmem [resolvable:$true] %s28
      %34 = dma.hbm_to_vmem [thread:$0]  %s1, 3840, %s29, [#allocation6], 256, 256, 16
    $region9: #{tpu_custom_call.1} parent=1 // pred_fallthru
      _
    // Predicated region
    $region10: #{tpu_custom_call.1} parent=1 // pred_check
      _
    $region11: #{tpu_custom_call.1} parent=1 // pred_check_branch
      %36 = sbr.rel (0) target = $region13
    $region12: #{tpu_custom_call.1} parent=1 // pred_region
      %s38 = ssub.s32 8192, 8192
      %39 = vsyncadd [#allocation6], %s38
      %s40 = sshll.u32 [#allocation7], 4
      %s41 = int_to_ptr.vmem [resolvable:$true] %s40
      %46 = dma.hbm_to_vmem [thread:$0]  %s2, 8192, %s41, [#allocation6], 256, 256, 16
    $region13: #{tpu_custom_call.1} parent=1 // pred_fallthru
      _
    // Predicated region
    $region14: #{tpu_custom_call.1} parent=1 // pred_check
      _
    $region15: #{tpu_custom_call.1} parent=1 // pred_check_branch
      %48 = sbr.rel (0) target = $region17
    $region16: #{tpu_custom_call.1} parent=1 // pred_region
      %49 = dma.done [#allocation3], 3840
    $region17: #{tpu_custom_call.1} parent=1 // pred_fallthru
      _
    // Predicated region
    $region18: #{tpu_custom_call.1} parent=1 // pred_check
      _
    $region19: #{tpu_custom_call.1} parent=1 // pred_check_branch
      %51 = sbr.rel (0) target = $region21
    $region20: #{tpu_custom_call.1} parent=1 // pred_region
      %52 = dma.done [#allocation6], 3840
    $region21: #{tpu_custom_call.1} parent=1 // pred_fallthru
      _
    // Predicated region
    $region22: #{tpu_custom_call.1} parent=1 // pred_check
      _
    $region23: #{tpu_custom_call.1} parent=1 // pred_check_branch
      %54 = sbr.rel (0) target = $region25
    $region24: #{tpu_custom_call.1} parent=1 // pred_region
      %55 = dma.done [#allocation6], 8192
    $region25: #{tpu_custom_call.1} parent=1 // pred_fallthru
      _
    %v56 = vld [vmem:[#allocation5] sm:$0xff]
    %v57 = vld [vmem:[#allocation5 + $0x8] sm:$0xff]
    %v58 = vld [vmem:[#allocation5 + $0x10] sm:$0xff]
    %v59 = vld [vmem:[#allocation5 + $0x18] sm:$0xff]
    %v60 = vld [vmem:[#allocation5 + $0x20] sm:$0xff]
    %v61 = vld [vmem:[#allocation5 + $0x28] sm:$0xff]
    %v62 = vld [vmem:[#allocation5 + $0x30] sm:$0xff]
    %v63 = vld [vmem:[#allocation5 + $0x38] sm:$0xff]
    %v64 = vld [vmem:[#allocation5 + $0x40] sm:$0xff]
    %v65 = vld [vmem:[#allocation5 + $0x48] sm:$0xff]
    %v66 = vld [vmem:[#allocation5 + $0x50] sm:$0xff]
    %v67 = vld [vmem:[#allocation5 + $0x58] sm:$0xff]
    %v68 = vld [vmem:[#allocation5 + $0x60] sm:$0xff]
    %v69 = vld [vmem:[#allocation5 + $0x68] sm:$0xff]
    %v70 = vld [vmem:[#allocation5 + $0x70] sm:$0xff]
    %v71 = vld [vmem:[#allocation5 + $0x78] sm:$0xff]
    %v72 = vld [vmem:[#allocation5 + $0x80] sm:$0xff]
    %v73 = vld [vmem:[#allocation5 + $0x88] sm:$0xff]
    %v74 = vld [vmem:[#allocation5 + $0x90] sm:$0xff]
    %v75 = vld [vmem:[#allocation5 + $0x98] sm:$0xff]
    %v76 = vld [vmem:[#allocation5 + $0xa0] sm:$0xff]
    %v77 = vld [vmem:[#allocation5 + $0xa8] sm:$0xff]
    %v78 = vld [vmem:[#allocation5 + $0xb0] sm:$0xff]
    %v79 = vld [vmem:[#allocation5 + $0xb8] sm:$0xff]
    %v80 = vld [vmem:[#allocation5 + $0xc0] sm:$0xff]
    %v81 = vld [vmem:[#allocation5 + $0xc8] sm:$0xff]
    %v82 = vld [vmem:[#allocation5 + $0xd0] sm:$0xff]
    %v83 = vld [vmem:[#allocation5 + $0xd8] sm:$0xff]
    %v84 = vld [vmem:[#allocation5 + $0xe0] sm:$0xff]
    %v85 = vld [vmem:[#allocation5 + $0xe8] sm:$0xff]
    %v86 = vld [vmem:[#allocation7] sm:$0xff]
    %v87 = vld [vmem:[#allocation7 + $0x8] sm:$0xff]
    %v88 = vld [vmem:[#allocation7 + $0x10] sm:$0xff]
    %v89 = vld [vmem:[#allocation7 + $0x18] sm:$0xff]
    %v90 = vld [vmem:[#allocation7 + $0x20] sm:$0xff]
    %v91 = vld [vmem:[#allocation7 + $0x28] sm:$0xff]
    %v92 = vld [vmem:[#allocation7 + $0x30] sm:$0xff]
    %v93 = vld [vmem:[#allocation7 + $0x38] sm:$0xff]
    %v94 = vld [vmem:[#allocation7 + $0x40] sm:$0xff]
    %v95 = vld [vmem:[#allocation7 + $0x48] sm:$0xff]
    %v96 = vld [vmem:[#allocation7 + $0x50] sm:$0xff]
    %v97 = vld [vmem:[#allocation7 + $0x58] sm:$0xff]
    %v98 = vld [vmem:[#allocation7 + $0x60] sm:$0xff]
    %v99 = vld [vmem:[#allocation7 + $0x68] sm:$0xff]
    %v100 = vld [vmem:[#allocation7 + $0x70] sm:$0xff]
    %v101 = vld [vmem:[#allocation7 + $0x78] sm:$0xff]
    %v102 = vld [vmem:[#allocation7 + $0x80] sm:$0xff]
    %v103 = vld [vmem:[#allocation7 + $0x88] sm:$0xff]
    %v104 = vld [vmem:[#allocation7 + $0x90] sm:$0xff]
    %v105 = vld [vmem:[#allocation7 + $0x98] sm:$0xff]
    %v106 = vld [vmem:[#allocation7 + $0xa0] sm:$0xff]
    %v107 = vld [vmem:[#allocation7 + $0xa8] sm:$0xff]
    %v108 = vld [vmem:[#allocation7 + $0xb0] sm:$0xff]
    %v109 = vld [vmem:[#allocation7 + $0xb8] sm:$0xff]
    %v110 = vld [vmem:[#allocation7 + $0xc0] sm:$0xff]
    %v111 = vld [vmem:[#allocation7 + $0xc8] sm:$0xff]
    %v112 = vld [vmem:[#allocation7 + $0xd0] sm:$0xff]
    %v113 = vld [vmem:[#allocation7 + $0xd8] sm:$0xff]
    %v114 = vld [vmem:[#allocation7 + $0xe0] sm:$0xff]
    %v115 = vld [vmem:[#allocation7 + $0xe8] sm:$0xff]
    %v116 = vld [vmem:[#allocation7 + $0xf0] sm:$0xff]
    %v117 = vld [vmem:[#allocation7 + $0xf8] sm:$0xff]
    %v118 = vld [vmem:[#allocation7 + $0x100] sm:$0xff]
    %v119 = vld [vmem:[#allocation7 + $0x108] sm:$0xff]
    %v120 = vld [vmem:[#allocation7 + $0x110] sm:$0xff]
    %v121 = vld [vmem:[#allocation7 + $0x118] sm:$0xff]
    %v122 = vld [vmem:[#allocation7 + $0x120] sm:$0xff]
    %v123 = vld [vmem:[#allocation7 + $0x128] sm:$0xff]
    %v124 = vld [vmem:[#allocation7 + $0x130] sm:$0xff]
    %v125 = vld [vmem:[#allocation7 + $0x138] sm:$0xff]
    %v126 = vld [vmem:[#allocation7 + $0x140] sm:$0xff]
    %v127 = vld [vmem:[#allocation7 + $0x148] sm:$0xff]
    %v128 = vld [vmem:[#allocation7 + $0x150] sm:$0xff]
    %v129 = vld [vmem:[#allocation7 + $0x158] sm:$0xff]
    %v130 = vld [vmem:[#allocation7 + $0x160] sm:$0xff]
    %v131 = vld [vmem:[#allocation7 + $0x168] sm:$0xff]
    %v132 = vld [vmem:[#allocation7 + $0x170] sm:$0xff]
    %v133 = vld [vmem:[#allocation7 + $0x178] sm:$0xff]
    %v134 = vld [vmem:[#allocation7 + $0x180] sm:$0xff]
    %v135 = vld [vmem:[#allocation7 + $0x188] sm:$0xff]
    %v136 = vld [vmem:[#allocation7 + $0x190] sm:$0xff]
    %v137 = vld [vmem:[#allocation7 + $0x198] sm:$0xff]
    %v138 = vld [vmem:[#allocation7 + $0x1a0] sm:$0xff]
    %v139 = vld [vmem:[#allocation7 + $0x1a8] sm:$0xff]
    %v140 = vld [vmem:[#allocation7 + $0x1b0] sm:$0xff]
    %v141 = vld [vmem:[#allocation7 + $0x1b8] sm:$0xff]
    %v142 = vld [vmem:[#allocation7 + $0x1c0] sm:$0xff]
    %v143 = vld [vmem:[#allocation7 + $0x1c8] sm:$0xff]
    %v144 = vld [vmem:[#allocation7 + $0x1d0] sm:$0xff]
    %v145 = vld [vmem:[#allocation7 + $0x1d8] sm:$0xff]
    %v146 = vld [vmem:[#allocation7 + $0x1e0] sm:$0xff]
    %v147 = vld [vmem:[#allocation7 + $0x1e8] sm:$0xff]
    %v148 = vld [vmem:[#allocation7 + $0x1f0] sm:$0xff]
    %v149 = vld [vmem:[#allocation7 + $0x1f8] sm:$0xff]
    %v150 = vand.u32 %v87, 4294901760
    %151 = vmatprep.subr.mxu0 %v150
    %v152 = vand.u32 %v86, 4294901760
    %153 = vmatpush1.msra.mxu0 %v152
    %v154 = vand.u32 %v89, 4294901760
    %155 = vmatprep.subr.mxu0 %v154
    %v156 = vand.u32 %v88, 4294901760
    %157 = vmatpush1.msra.mxu0 %v156
    %v158 = vand.u32 %v91, 4294901760
    %159 = vmatprep.subr.mxu0 %v158
    %v160 = vand.u32 %v90, 4294901760
    %161 = vmatpush1.msra.mxu0 %v160
    %v162 = vand.u32 %v93, 4294901760
    %163 = vmatprep.subr.mxu0 %v162
    %v164 = vand.u32 %v92, 4294901760
    %165 = vmatpush1.msra.mxu0 %v164
    %v166 = vand.u32 %v95, 4294901760
    %167 = vmatprep.subr.mxu0 %v166
    %v168 = vand.u32 %v94, 4294901760
    %169 = vmatpush1.msra.mxu0 %v168
    %v170 = vand.u32 %v97, 4294901760
    %171 = vmatprep.subr.mxu0 %v170
    %v172 = vand.u32 %v96, 4294901760
    %173 = vmatpush1.msra.mxu0 %v172
    %v174 = vand.u32 %v99, 4294901760
    %175 = vmatprep.subr.mxu0 %v174
    %v176 = vand.u32 %v98, 4294901760
    %177 = vmatpush1.msra.mxu0 %v176
    %v178 = vand.u32 %v101, 4294901760
    %179 = vmatprep.subr.mxu0 %v178
    %v180 = vand.u32 %v100, 4294901760
    %181 = vmatpush1.msra.mxu0 %v180
    %v182 = vand.u32 %v103, 4294901760
    %183 = vmatprep.subr.mxu0 %v182
    %v184 = vand.u32 %v102, 4294901760
    %185 = vmatpush1.msra.mxu0 %v184
    %v186 = vand.u32 %v105, 4294901760
    %187 = vmatprep.subr.mxu0 %v186
    %v188 = vand.u32 %v104, 4294901760
    %189 = vmatpush1.msra.mxu0 %v188
    %v190 = vand.u32 %v107, 4294901760
    %191 = vmatprep.subr.mxu0 %v190
    %v192 = vand.u32 %v106, 4294901760
    %193 = vmatpush1.msra.mxu0 %v192
    %v194 = vand.u32 %v109, 4294901760
    %195 = vmatprep.subr.mxu0 %v194
    %v196 = vand.u32 %v108, 4294901760
    %197 = vmatpush1.msra.mxu0 %v196
    %v198 = vand.u32 %v111, 4294901760
    %199 = vmatprep.subr.mxu0 %v198
    %v200 = vand.u32 %v110, 4294901760
    %201 = vmatpush1.msra.mxu0 %v200
    %v202 = vand.u32 %v113, 4294901760
    %203 = vmatprep.subr.mxu0 %v202
    %v204 = vand.u32 %v112, 4294901760
    %205 = vmatpush1.msra.mxu0 %v204
    %v206 = vand.u32 %v115, 4294901760
    %207 = vmatprep.subr.mxu0 %v206
    %v208 = vand.u32 %v114, 4294901760
    %209 = vmatpush1.msra.mxu0 %v208
    %v210 = vand.u32 %v117, 4294901760
    %211 = vmatprep.subr.mxu0 %v210
    %v212 = vand.u32 %v116, 4294901760
    %213 = vmatpush1.msra.mxu0 %v212
    %v214 = vand.u32 %v119, 4294901760
    %215 = vmatprep.subr.mxu0 %v214
    %v216 = vand.u32 %v118, 4294901760
    %217 = vmatpush1.msra.mxu0 %v216
    %v218 = vand.u32 %v121, 4294901760
    %219 = vmatprep.subr.mxu0 %v218
    %v220 = vand.u32 %v120, 4294901760
    %221 = vmatpush1.msra.mxu0 %v220
    %v222 = vand.u32 %v123, 4294901760
    %223 = vmatprep.subr.mxu0 %v222
    %v224 = vand.u32 %v122, 4294901760
    %225 = vmatpush1.msra.mxu0 %v224
    %v226 = vand.u32 %v125, 4294901760
    %227 = vmatprep.subr.mxu0 %v226
    %v228 = vand.u32 %v124, 4294901760
    %229 = vmatpush1.msra.mxu0 %v228
    %v230 = vand.u32 %v127, 4294901760
    %231 = vmatprep.subr.mxu0 %v230
    %v232 = vand.u32 %v126, 4294901760
    %233 = vmatpush1.msra.mxu0 %v232
    %v234 = vand.u32 %v129, 4294901760
    %235 = vmatprep.subr.mxu0 %v234
    %v236 = vand.u32 %v128, 4294901760
    %237 = vmatpush1.msra.mxu0 %v236
    %v238 = vand.u32 %v131, 4294901760
    %239 = vmatprep.subr.mxu0 %v238
    %v240 = vand.u32 %v130, 4294901760
    %241 = vmatpush1.msra.mxu0 %v240
    %v242 = vand.u32 %v133, 4294901760
    %243 = vmatprep.subr.mxu0 %v242
    %v244 = vand.u32 %v132, 4294901760
    %245 = vmatpush1.msra.mxu0 %v244
    %v246 = vand.u32 %v135, 4294901760
    %247 = vmatprep.subr.mxu0 %v246
    %v248 = vand.u32 %v134, 4294901760
    %249 = vmatpush1.msra.mxu0 %v248
    %v250 = vand.u32 %v137, 4294901760
    %251 = vmatprep.subr.mxu0 %v250
    %v252 = vand.u32 %v136, 4294901760
    %253 = vmatpush1.msra.mxu0 %v252
    %v254 = vand.u32 %v139, 4294901760
    %255 = vmatprep.subr.mxu0 %v254
    %v256 = vand.u32 %v138, 4294901760
    %257 = vmatpush1.msra.mxu0 %v256
    %v258 = vand.u32 %v141, 4294901760
    %259 = vmatprep.subr.mxu0 %v258
    %v260 = vand.u32 %v140, 4294901760
    %261 = vmatpush1.msra.mxu0 %v260
    %v262 = vand.u32 %v143, 4294901760
    %263 = vmatprep.subr.mxu0 %v262
    %v264 = vand.u32 %v142, 4294901760
    %265 = vmatpush1.msra.mxu0 %v264
    %v266 = vand.u32 %v145, 4294901760
    %267 = vmatprep.subr.mxu0 %v266
    %v268 = vand.u32 %v144, 4294901760
    %269 = vmatpush1.msra.mxu0 %v268
    %v270 = vand.u32 %v147, 4294901760
    %271 = vmatprep.subr.mxu0 %v270
    %v272 = vand.u32 %v146, 4294901760
    %273 = vmatpush1.msra.mxu0 %v272
    %v274 = vand.u32 %v149, 4294901760
    %275 = vmatprep.subr.mxu0 %v274
    %v276 = vand.u32 %v148, 4294901760
    %277 = vmatpush1.msra.mxu0 %v276
    %v278 = vand.u32 %v57, 4294901760
    %v279 = vsub.f32 %v57, %v278
    %v280 = vand.u32 %v279, 4294901760
    %v281 = vsub.f32 %v279, %v280
    %v282 = vand.u32 %v281, 4294901760
    %283 = vmatprep.mubr.f32.mxu0 %v282
    %v284 = vand.u32 %v56, 4294901760
    %v285 = vsub.f32 %v56, %v284
    %v286 = vand.u32 %v285, 4294901760
    %v287 = vsub.f32 %v285, %v286
    %v288 = vand.u32 %v287, 4294901760
    %289 = vmatmul.mubr.f32.gmra.mrb[0].mxu0 %v288
    %v290 = vpop.f32.mrb[0].mxu0
    %v291 = vadd.f32 0.0, %v290
    %v292 = vpop.f32.mrb[0].mxu0
    %v293 = vadd.f32 0.0, %v292
    %v294 = vand.u32 %v59, 4294901760
    %v295 = vsub.f32 %v59, %v294
    %v296 = vand.u32 %v295, 4294901760
    %v297 = vsub.f32 %v295, %v296
    %v298 = vand.u32 %v297, 4294901760
    %299 = vmatprep.mubr.f32.mxu0 %v298
    %v300 = vand.u32 %v58, 4294901760
    %v301 = vsub.f32 %v58, %v300
    %v302 = vand.u32 %v301, 4294901760
    %v303 = vsub.f32 %v301, %v302
    %v304 = vand.u32 %v303, 4294901760
    %305 = vmatmul.mubr.f32.gmra.mrb[0].mxu0 %v304
    %v306 = vpop.f32.mrb[0].mxu0
    %v307 = vadd.f32 0.0, %v306
    %v308 = vpop.f32.mrb[0].mxu0
    %v309 = vadd.f32 0.0, %v308
    %v310 = vand.u32 %v61, 4294901760
    %v311 = vsub.f32 %v61, %v310
    %v312 = vand.u32 %v311, 4294901760
    %v313 = vsub.f32 %v311, %v312
    %v314 = vand.u32 %v313, 4294901760
    %315 = vmatprep.mubr.f32.mxu0 %v314
    %v316 = vand.u32 %v60, 4294901760
    %v317 = vsub.f32 %v60, %v316
    %v318 = vand.u32 %v317, 4294901760
    %v319 = vsub.f32 %v317, %v318
    %v320 = vand.u32 %v319, 4294901760
    %321 = vmatmul.mubr.f32.gmra.mrb[0].mxu0 %v320
    %v322 = vpop.f32.mrb[0].mxu0
    %v323 = vadd.f32 0.0, %v322
    %v324 = vpop.f32.mrb[0].mxu0
    %v325 = vadd.f32 0.0, %v324
    %v326 = vand.u32 %v63, 4294901760
    %v327 = vsub.f32 %v63, %v326
    %v328 = vand.u32 %v327, 4294901760
    %v329 = vsub.f32 %v327, %v328
    %v330 = vand.u32 %v329, 4294901760
    %331 = vmatprep.mubr.f32.mxu0 %v330
    %v332 = vand.u32 %v62, 4294901760
    %v333 = vsub.f32 %v62, %v332
    %v334 = vand.u32 %v333, 4294901760
    %v335 = vsub.f32 %v333, %v334
    %v336 = vand.u32 %v335, 4294901760
    %337 = vmatmul.mubr.f32.gmra.mrb[0].mxu0 %v336
    %v338 = vpop.f32.mrb[0].mxu0
    %v339 = vadd.f32 0.0, %v338
    %v340 = vpop.f32.mrb[0].mxu0
    %v341 = vadd.f32 0.0, %v340
    %v342 = vand.u32 %v65, 4294901760
    %v343 = vsub.f32 %v65, %v342
    %v344 = vand.u32 %v343, 4294901760
    %v345 = vsub.f32 %v343, %v344
    %v346 = vand.u32 %v345, 4294901760
    %347 = vmatprep.mubr.f32.mxu0 %v346
    %v348 = vand.u32 %v64, 4294901760
    %v349 = vsub.f32 %v64, %v348
    %v350 = vand.u32 %v349, 4294901760
    %v351 = vsub.f32 %v349, %v350
    %v352 = vand.u32 %v351, 4294901760
    %353 = vmatmul.mubr.f32.gmra.mrb[0].mxu0 %v352
    %v354 = vpop.f32.mrb[0].mxu0
    %v355 = vadd.f32 0.0, %v354
    %v356 = vpop.f32.mrb[0].mxu0
    %v357 = vadd.f32 0.0, %v356
    %v358 = vand.u32 %v67, 4294901760
    %v359 = vsub.f32 %v67, %v358
    %v360 = vand.u32 %v359, 4294901760
    %v361 = vsub.f32 %v359, %v360
    %v362 = vand.u32 %v361, 4294901760
    %363 = vmatprep.mubr.f32.mxu0 %v362
    %v364 = vand.u32 %v66, 4294901760
    %v365 = vsub.f32 %v66, %v364
    %v366 = vand.u32 %v365, 4294901760
    %v367 = vsub.f32 %v365, %v366
    %v368 = vand.u32 %v367, 4294901760
    %369 = vmatmul.mubr.f32.gmra.mrb[0].mxu0 %v368
    %v370 = vpop.f32.mrb[0].mxu0
    %v371 = vadd.f32 0.0, %v370
    %v372 = vpop.f32.mrb[0].mxu0
    %v373 = vadd.f32 0.0, %v372
    %v374 = vand.u32 %v69, 4294901760
    %v375 = vsub.f32 %v69, %v374
    %v376 = vand.u32 %v375, 4294901760
    %v377 = vsub.f32 %v375, %v376
    %v378 = vand.u32 %v377, 4294901760
    %379 = vmatprep.mubr.f32.mxu0 %v378
    %v380 = vand.u32 %v68, 4294901760
    %v381 = vsub.f32 %v68, %v380
    %v382 = vand.u32 %v381, 4294901760
    %v383 = vsub.f32 %v381, %v382
    %v384 = vand.u32 %v383, 4294901760
    %385 = vmatmul.mubr.f32.gmra.mrb[0].mxu0 %v384
    %v386 = vpop.f32.mrb[0].mxu0
    %v387 = vadd.f32 0.0, %v386
    %v388 = vpop.f32.mrb[0].mxu0
    %v389 = vadd.f32 0.0, %v388
    %v390 = vand.u32 %v71, 4294901760
    %v391 = vsub.f32 %v71, %v390
    %v392 = vand.u32 %v391, 4294901760
    %v393 = vsub.f32 %v391, %v392
    %v394 = vand.u32 %v393, 4294901760
    %395 = vmatprep.mubr.f32.mxu0 %v394
    %v396 = vand.u32 %v70, 4294901760
    %v397 = vsub.f32 %v70, %v396
    %v398 = vand.u32 %v397, 4294901760
    %v399 = vsub.f32 %v397, %v398
    %v400 = vand.u32 %v399, 4294901760
    %401 = vmatmul.mubr.f32.gmra.mrb[0].mxu0 %v400
    %v402 = vpop.f32.mrb[0].mxu0
    %v403 = vadd.f32 0.0, %v402
    %v404 = vpop.f32.mrb[0].mxu0
    %v405 = vadd.f32 0.0, %v404
    %v406 = vand.u32 %v73, 4294901760
    %v407 = vsub.f32 %v73, %v406
    %v408 = vand.u32 %v407, 4294901760
    %v409 = vsub.f32 %v407, %v408
    %v410 = vand.u32 %v409, 4294901760
    %411 = vmatprep.mubr.f32.mxu0 %v410
    %v412 = vand.u32 %v72, 4294901760
    %v413 = vsub.f32 %v72, %v412
    %v414 = vand.u32 %v413, 4294901760
    %v415 = vsub.f32 %v413, %v414
    %v416 = vand.u32 %v415, 4294901760
    %417 = vmatmul.mubr.f32.gmra.mrb[0].mxu0 %v416
    %v418 = vpop.f32.mrb[0].mxu0
    %v419 = vadd.f32 0.0, %v418
    %v420 = vpop.f32.mrb[0].mxu0
    %v421 = vadd.f32 0.0, %v420
    %v422 = vand.u32 %v75, 4294901760
    %v423 = vsub.f32 %v75, %v422
    %v424 = vand.u32 %v423, 4294901760
    %v425 = vsub.f32 %v423, %v424
    %v426 = vand.u32 %v425, 4294901760
    %427 = vmatprep.mubr.f32.mxu0 %v426
    %v428 = vand.u32 %v74, 4294901760
    %v429 = vsub.f32 %v74, %v428
    %v430 = vand.u32 %v429, 4294901760
    %v431 = vsub.f32 %v429, %v430
    %v432 = vand.u32 %v431, 4294901760
    %433 = vmatmul.mubr.f32.gmra.mrb[0].mxu0 %v432
    %v434 = vpop.f32.mrb[0].mxu0
    %v435 = vadd.f32 0.0, %v434
    %v436 = vpop.f32.mrb[0].mxu0
    %v437 = vadd.f32 0.0, %v436
    %v438 = vand.u32 %v77, 4294901760
    %v439 = vsub.f32 %v77, %v438
    %v440 = vand.u32 %v439, 4294901760
    %v441 = vsub.f32 %v439, %v440
    %v442 = vand.u32 %v441, 4294901760
    %443 = vmatprep.mubr.f32.mxu0 %v442
    %v444 = vand.u32 %v76, 4294901760
    %v445 = vsub.f32 %v76, %v444
    %v446 = vand.u32 %v445, 4294901760
    %v447 = vsub.f32 %v445, %v446
    %v448 = vand.u32 %v447, 4294901760
    %449 = vmatmul.mubr.f32.gmra.mrb[0].mxu0 %v448
    %v450 = vpop.f32.mrb[0].mxu0
    %v451 = vadd.f32 0.0, %v450
    %v452 = vpop.f32.mrb[0].mxu0
    %v453 = vadd.f32 0.0, %v452
    %v454 = vand.u32 %v79, 4294901760
    %v455 = vsub.f32 %v79, %v454
    %v456 = vand.u32 %v455, 4294901760
    %v457 = vsub.f32 %v455, %v456
    %v458 = vand.u32 %v457, 4294901760
    %459 = vmatprep.mubr.f32.mxu0 %v458
    %v460 = vand.u32 %v78, 4294901760
    %v461 = vsub.f32 %v78, %v460
    %v462 = vand.u32 %v461, 4294901760
    %v463 = vsub.f32 %v461, %v462
    %v464 = vand.u32 %v463, 4294901760
    %465 = vmatmul.mubr.f32.gmra.mrb[0].mxu0 %v464
    %v466 = vpop.f32.mrb[0].mxu0
    %v467 = vadd.f32 0.0, %v466
    %v468 = vpop.f32.mrb[0].mxu0
    %v469 = vadd.f32 0.0, %v468
    %v470 = vand.u32 %v81, 4294901760
    %v471 = vsub.f32 %v81, %v470
    %v472 = vand.u32 %v471, 4294901760
    %v473 = vsub.f32 %v471, %v472
    %v474 = vand.u32 %v473, 4294901760
    %475 = vmatprep.mubr.f32.mxu0 %v474
    %v476 = vand.u32 %v80, 4294901760
    %v477 = vsub.f32 %v80, %v476
    %v478 = vand.u32 %v477, 4294901760
    %v479 = vsub.f32 %v477, %v478
    %v480 = vand.u32 %v479, 4294901760
    %481 = vmatmul.mubr.f32.gmra.mrb[0].mxu0 %v480
    %v482 = vpop.f32.mrb[0].mxu0
    %v483 = vadd.f32 0.0, %v482
    %v484 = vpop.f32.mrb[0].mxu0
    %v485 = vadd.f32 0.0, %v484
    %v486 = vand.u32 %v83, 4294901760
    %v487 = vsub.f32 %v83, %v486
    %v488 = vand.u32 %v487, 4294901760
    %v489 = vsub.f32 %v487, %v488
    %v490 = vand.u32 %v489, 4294901760
    %491 = vmatprep.mubr.f32.mxu0 %v490
    %v492 = vand.u32 %v82, 4294901760
    %v493 = vsub.f32 %v82, %v492
    %v494 = vand.u32 %v493, 4294901760
    %v495 = vsub.f32 %v493, %v494
    %v496 = vand.u32 %v495, 4294901760
    %497 = vmatmul.mubr.f32.gmra.mrb[0].mxu0 %v496
    %v498 = vpop.f32.mrb[0].mxu0
    %v499 = vadd.f32 0.0, %v498
    %v500 = vpop.f32.mrb[0].mxu0
    %v501 = vadd.f32 0.0, %v500
    %v502 = vand.u32 %v85, 4294901760
    %v503 = vsub.f32 %v85, %v502
    %v504 = vand.u32 %v503, 4294901760
    %v505 = vsub.f32 %v503, %v504
    %v506 = vand.u32 %v505, 4294901760
    %507 = vmatprep.mubr.f32.mxu0 %v506
    %v508 = vand.u32 %v84, 4294901760
    %v509 = vsub.f32 %v84, %v508
    %v510 = vand.u32 %v509, 4294901760
    %v511 = vsub.f32 %v509, %v510
    %v512 = vand.u32 %v511, 4294901760
    %513 = vmatmul.mubr.f32.gmra.mrb[0].mxu0 %v512
    %v514 = vpop.f32.mrb[0].mxu0
    %v515 = vadd.f32 0.0, %v514
    %v516 = vpop.f32.mrb[0].mxu0
    %v517 = vadd.f32 0.0, %v516
    %518 = vdwg.mxu0
    %v519 = vand.u32 %v87, 4294901760
    %v520 = vsub.f32 %v87, %v519
    %v521 = vand.u32 %v520, 4294901760
    %v522 = vsub.f32 %v520, %v521
    %v523 = vand.u32 %v522, 4294901760
    %524 = vmatprep.subr.mxu0 %v523
    %v525 = vand.u32 %v86, 4294901760
    %v526 = vsub.f32 %v86, %v525
    %v527 = vand.u32 %v526, 4294901760
    %v528 = vsub.f32 %v526, %v527
    %v529 = vand.u32 %v528, 4294901760
    %530 = vmatpush1.msra.mxu0 %v529
    %v531 = vand.u32 %v89, 4294901760
    %v532 = vsub.f32 %v89, %v531
    %v533 = vand.u32 %v532, 4294901760
    %v534 = vsub.f32 %v532, %v533
    %v535 = vand.u32 %v534, 4294901760
    %536 = vmatprep.subr.mxu0 %v535
    %v537 = vand.u32 %v88, 4294901760
    %v538 = vsub.f32 %v88, %v537
    %v539 = vand.u32 %v538, 4294901760
    %v540 = vsub.f32 %v538, %v539
    %v541 = vand.u32 %v540, 4294901760
    %542 = vmatpush1.msra.mxu0 %v541
    %v543 = vand.u32 %v91, 4294901760
    %v544 = vsub.f32 %v91, %v543
    %v545 = vand.u32 %v544, 4294901760
    %v546 = vsub.f32 %v544, %v545
    %v547 = vand.u32 %v546, 4294901760
    %548 = vmatprep.subr.mxu0 %v547
    %v549 = vand.u32 %v90, 4294901760
    %v550 = vsub.f32 %v90, %v549
    %v551 = vand.u32 %v550, 4294901760
    %v552 = vsub.f32 %v550, %v551
    %v553 = vand.u32 %v552, 4294901760
    %554 = vmatpush1.msra.mxu0 %v553
    %v555 = vand.u32 %v93, 4294901760
    %v556 = vsub.f32 %v93, %v555
    %v557 = vand.u32 %v556, 4294901760
    %v558 = vsub.f32 %v556, %v557
    %v559 = vand.u32 %v558, 4294901760
    %560 = vmatprep.subr.mxu0 %v559
    %v561 = vand.u32 %v92, 4294901760
    %v562 = vsub.f32 %v92, %v561
    %v563 = vand.u32 %v562, 4294901760
    %v564 = vsub.f32 %v562, %v563
    %v565 = vand.u32 %v564, 4294901760
    %566 = vmatpush1.msra.mxu0 %v565
    %v567 = vand.u32 %v95, 4294901760
    %v568 = vsub.f32 %v95, %v567
    %v569 = vand.u32 %v568, 4294901760
    %v570 = vsub.f32 %v568, %v569
    %v571 = vand.u32 %v570, 4294901760
    %572 = vmatprep.subr.mxu0 %v571
    %v573 = vand.u32 %v94, 4294901760
    %v574 = vsub.f32 %v94, %v573
    %v575 = vand.u32 %v574, 4294901760
    %v576 = vsub.f32 %v574, %v575
    %v577 = vand.u32 %v576, 4294901760
    %578 = vmatpush1.msra.mxu0 %v577
    %v579 = vand.u32 %v97, 4294901760
    %v580 = vsub.f32 %v97, %v579
    %v581 = vand.u32 %v580, 4294901760
    %v582 = vsub.f32 %v580, %v581
    %v583 = vand.u32 %v582, 4294901760
    %584 = vmatprep.subr.mxu0 %v583
    %v585 = vand.u32 %v96, 4294901760
    %v586 = vsub.f32 %v96, %v585
    %v587 = vand.u32 %v586, 4294901760
    %v588 = vsub.f32 %v586, %v587
    %v589 = vand.u32 %v588, 4294901760
    %590 = vmatpush1.msra.mxu0 %v589
    %v591 = vand.u32 %v99, 4294901760
    %v592 = vsub.f32 %v99, %v591
    %v593 = vand.u32 %v592, 4294901760
    %v594 = vsub.f32 %v592, %v593
    %v595 = vand.u32 %v594, 4294901760
    %596 = vmatprep.subr.mxu0 %v595
    %v597 = vand.u32 %v98, 4294901760
    %v598 = vsub.f32 %v98, %v597
    %v599 = vand.u32 %v598, 4294901760
    %v600 = vsub.f32 %v598, %v599
    %v601 = vand.u32 %v600, 4294901760
    %602 = vmatpush1.msra.mxu0 %v601
    %v603 = vand.u32 %v101, 4294901760
    %v604 = vsub.f32 %v101, %v603
    %v605 = vand.u32 %v604, 4294901760
    %v606 = vsub.f32 %v604, %v605
    %v607 = vand.u32 %v606, 4294901760
    %608 = vmatprep.subr.mxu0 %v607
    %v609 = vand.u32 %v100, 4294901760
    %v610 = vsub.f32 %v100, %v609
    %v611 = vand.u32 %v610, 4294901760
    %v612 = vsub.f32 %v610, %v611
    %v613 = vand.u32 %v612, 4294901760
    %614 = vmatpush1.msra.mxu0 %v613
    %v615 = vand.u32 %v103, 4294901760
    %v616 = vsub.f32 %v103, %v615
    %v617 = vand.u32 %v616, 4294901760
    %v618 = vsub.f32 %v616, %v617
    %v619 = vand.u32 %v618, 4294901760
    %620 = vmatprep.subr.mxu0 %v619
    %v621 = vand.u32 %v102, 4294901760
    %v622 = vsub.f32 %v102, %v621
    %v623 = vand.u32 %v622, 4294901760
    %v624 = vsub.f32 %v622, %v623
    %v625 = vand.u32 %v624, 4294901760
    %626 = vmatpush1.msra.mxu0 %v625
    %v627 = vand.u32 %v105, 4294901760
    %v628 = vsub.f32 %v105, %v627
    %v629 = vand.u32 %v628, 4294901760
    %v630 = vsub.f32 %v628, %v629
    %v631 = vand.u32 %v630, 4294901760
    %632 = vmatprep.subr.mxu0 %v631
    %v633 = vand.u32 %v104, 4294901760
    %v634 = vsub.f32 %v104, %v633
    %v635 = vand.u32 %v634, 4294901760
    %v636 = vsub.f32 %v634, %v635
    %v637 = vand.u32 %v636, 4294901760
    %638 = vmatpush1.msra.mxu0 %v637
    %v639 = vand.u32 %v107, 4294901760
    %v640 = vsub.f32 %v107, %v639
    %v641 = vand.u32 %v640, 4294901760
    %v642 = vsub.f32 %v640, %v641
    %v643 = vand.u32 %v642, 4294901760
    %644 = vmatprep.subr.mxu0 %v643
    %v645 = vand.u32 %v106, 4294901760
    %v646 = vsub.f32 %v106, %v645
    %v647 = vand.u32 %v646, 4294901760
    %v648 = vsub.f32 %v646, %v647
    %v649 = vand.u32 %v648, 4294901760
    %650 = vmatpush1.msra.mxu0 %v649
    %v651 = vand.u32 %v109, 4294901760
    %v652 = vsub.f32 %v109, %v651
    %v653 = vand.u32 %v652, 4294901760
    %v654 = vsub.f32 %v652, %v653
    %v655 = vand.u32 %v654, 4294901760
    %656 = vmatprep.subr.mxu0 %v655
    %v657 = vand.u32 %v108, 4294901760
    %v658 = vsub.f32 %v108, %v657
    %v659 = vand.u32 %v658, 4294901760
    %v660 = vsub.f32 %v658, %v659
    %v661 = vand.u32 %v660, 4294901760
    %662 = vmatpush1.msra.mxu0 %v661
    %v663 = vand.u32 %v111, 4294901760
    %v664 = vsub.f32 %v111, %v663
    %v665 = vand.u32 %v664, 4294901760
    %v666 = vsub.f32 %v664, %v665
    %v667 = vand.u32 %v666, 4294901760
    %668 = vmatprep.subr.mxu0 %v667
    %v669 = vand.u32 %v110, 4294901760
    %v670 = vsub.f32 %v110, %v669
    %v671 = vand.u32 %v670, 4294901760
    %v672 = vsub.f32 %v670, %v671
    %v673 = vand.u32 %v672, 4294901760
    %674 = vmatpush1.msra.mxu0 %v673
    %v675 = vand.u32 %v113, 4294901760
    %v676 = vsub.f32 %v113, %v675
    %v677 = vand.u32 %v676, 4294901760
    %v678 = vsub.f32 %v676, %v677
    %v679 = vand.u32 %v678, 4294901760
    %680 = vmatprep.subr.mxu0 %v679
    %v681 = vand.u32 %v112, 4294901760
    %v682 = vsub.f32 %v112, %v681
    %v683 = vand.u32 %v682, 4294901760
    %v684 = vsub.f32 %v682, %v683
    %v685 = vand.u32 %v684, 4294901760
    %686 = vmatpush1.msra.mxu0 %v685
    %v687 = vand.u32 %v115, 4294901760
    %v688 = vsub.f32 %v115, %v687
    %v689 = vand.u32 %v688, 4294901760
    %v690 = vsub.f32 %v688, %v689
    %v691 = vand.u32 %v690, 4294901760
    %692 = vmatprep.subr.mxu0 %v691
    %v693 = vand.u32 %v114, 4294901760
    %v694 = vsub.f32 %v114, %v693
    %v695 = vand.u32 %v694, 4294901760
    %v696 = vsub.f32 %v694, %v695
    %v697 = vand.u32 %v696, 4294901760
    %698 = vmatpush1.msra.mxu0 %v697
    %v699 = vand.u32 %v117, 4294901760
    %v700 = vsub.f32 %v117, %v699
    %v701 = vand.u32 %v700, 4294901760
    %v702 = vsub.f32 %v700, %v701
    %v703 = vand.u32 %v702, 4294901760
    %704 = vmatprep.subr.mxu0 %v703
    %v705 = vand.u32 %v116, 4294901760
    %v706 = vsub.f32 %v116, %v705
    %v707 = vand.u32 %v706, 4294901760
    %v708 = vsub.f32 %v706, %v707
    %v709 = vand.u32 %v708, 4294901760
    %710 = vmatpush1.msra.mxu0 %v709
    %v711 = vand.u32 %v119, 4294901760
    %v712 = vsub.f32 %v119, %v711
    %v713 = vand.u32 %v712, 4294901760
    %v714 = vsub.f32 %v712, %v713
    %v715 = vand.u32 %v714, 4294901760
    %716 = vmatprep.subr.mxu0 %v715
    %v717 = vand.u32 %v118, 4294901760
    %v718 = vsub.f32 %v118, %v717
    %v719 = vand.u32 %v718, 4294901760
    %v720 = vsub.f32 %v718, %v719
    %v721 = vand.u32 %v720, 4294901760
    %722 = vmatpush1.msra.mxu0 %v721
    %v723 = vand.u32 %v121, 4294901760
    %v724 = vsub.f32 %v121, %v723
    %v725 = vand.u32 %v724, 4294901760
    %v726 = vsub.f32 %v724, %v725
    %v727 = vand.u32 %v726, 4294901760
    %728 = vmatprep.subr.mxu0 %v727
    %v729 = vand.u32 %v120, 4294901760
    %v730 = vsub.f32 %v120, %v729
    %v731 = vand.u32 %v730, 4294901760
    %v732 = vsub.f32 %v730, %v731
    %v733 = vand.u32 %v732, 4294901760
    %734 = vmatpush1.msra.mxu0 %v733
    %v735 = vand.u32 %v123, 4294901760
    %v736 = vsub.f32 %v123, %v735
    %v737 = vand.u32 %v736, 4294901760
    %v738 = vsub.f32 %v736, %v737
    %v739 = vand.u32 %v738, 4294901760
    %740 = vmatprep.subr.mxu0 %v739
    %v741 = vand.u32 %v122, 4294901760
    %v742 = vsub.f32 %v122, %v741
    %v743 = vand.u32 %v742, 4294901760
    %v744 = vsub.f32 %v742, %v743
    %v745 = vand.u32 %v744, 4294901760
    %746 = vmatpush1.msra.mxu0 %v745
    %v747 = vand.u32 %v125, 4294901760
    %v748 = vsub.f32 %v125, %v747
    %v749 = vand.u32 %v748, 4294901760
    %v750 = vsub.f32 %v748, %v749
    %v751 = vand.u32 %v750, 4294901760
    %752 = vmatprep.subr.mxu0 %v751
    %v753 = vand.u32 %v124, 4294901760
    %v754 = vsub.f32 %v124, %v753
    %v755 = vand.u32 %v754, 4294901760
    %v756 = vsub.f32 %v754, %v755
    %v757 = vand.u32 %v756, 4294901760
    %758 = vmatpush1.msra.mxu0 %v757
    %v759 = vand.u32 %v127, 4294901760
    %v760 = vsub.f32 %v127, %v759
    %v761 = vand.u32 %v760, 4294901760
    %v762 = vsub.f32 %v760, %v761
    %v763 = vand.u32 %v762, 4294901760
    %764 = vmatprep.subr.mxu0 %v763
    %v765 = vand.u32 %v126, 4294901760
    %v766 = vsub.f32 %v126, %v765
    %v767 = vand.u32 %v766, 4294901760
    %v768 = vsub.f32 %v766, %v767
    %v769 = vand.u32 %v768, 4294901760
    %770 = vmatpush1.msra.mxu0 %v769
    %v771 = vand.u32 %v129, 4294901760
    %v772 = vsub.f32 %v129, %v771
    %v773 = vand.u32 %v772, 4294901760
    %v774 = vsub.f32 %v772, %v773
    %v775 = vand.u32 %v774, 4294901760
    %776 = vmatprep.subr.mxu0 %v775
    %v777 = vand.u32 %v128, 4294901760
    %v778 = vsub.f32 %v128, %v777
    %v779 = vand.u32 %v778, 4294901760
    %v780 = vsub.f32 %v778, %v779
    %v781 = vand.u32 %v780, 4294901760
    %782 = vmatpush1.msra.mxu0 %v781
    %v783 = vand.u32 %v131, 4294901760
    %v784 = vsub.f32 %v131, %v783
    %v785 = vand.u32 %v784, 4294901760
    %v786 = vsub.f32 %v784, %v785
    %v787 = vand.u32 %v786, 4294901760
    %788 = vmatprep.subr.mxu0 %v787
    %v789 = vand.u32 %v130, 4294901760
    %v790 = vsub.f32 %v130, %v789
    %v791 = vand.u32 %v790, 4294901760
    %v792 = vsub.f32 %v790, %v791
    %v793 = vand.u32 %v792, 4294901760
    %794 = vmatpush1.msra.mxu0 %v793
    %v795 = vand.u32 %v133, 4294901760
    %v796 = vsub.f32 %v133, %v795
    %v797 = vand.u32 %v796, 4294901760
    %v798 = vsub.f32 %v796, %v797
    %v799 = vand.u32 %v798, 4294901760
    %800 = vmatprep.subr.mxu0 %v799
    %v801 = vand.u32 %v132, 4294901760
    %v802 = vsub.f32 %v132, %v801
    %v803 = vand.u32 %v802, 4294901760
    %v804 = vsub.f32 %v802, %v803
    %v805 = vand.u32 %v804, 4294901760
    %806 = vmatpush1.msra.mxu0 %v805
    %v807 = vand.u32 %v135, 4294901760
    %v808 = vsub.f32 %v135, %v807
    %v809 = vand.u32 %v808, 4294901760
    %v810 = vsub.f32 %v808, %v809
    %v811 = vand.u32 %v810, 4294901760
    %812 = vmatprep.subr.mxu0 %v811
    %v813 = vand.u32 %v134, 4294901760
    %v814 = vsub.f32 %v134, %v813
    %v815 = vand.u32 %v814, 4294901760
    %v816 = vsub.f32 %v814, %v815
    %v817 = vand.u32 %v816, 4294901760
    %818 = vmatpush1.msra.mxu0 %v817
    %v819 = vand.u32 %v137, 4294901760
    %v820 = vsub.f32 %v137, %v819
    %v821 = vand.u32 %v820, 4294901760
    %v822 = vsub.f32 %v820, %v821
    %v823 = vand.u32 %v822, 4294901760
    %824 = vmatprep.subr.mxu0 %v823
    %v825 = vand.u32 %v136, 4294901760
    %v826 = vsub.f32 %v136, %v825
    %v827 = vand.u32 %v826, 4294901760
    %v828 = vsub.f32 %v826, %v827
    %v829 = vand.u32 %v828, 4294901760
    %830 = vmatpush1.msra.mxu0 %v829
    %v831 = vand.u32 %v139, 4294901760
    %v832 = vsub.f32 %v139, %v831
    %v833 = vand.u32 %v832, 4294901760
    %v834 = vsub.f32 %v832, %v833
    %v835 = vand.u32 %v834, 4294901760
    %836 = vmatprep.subr.mxu0 %v835
    %v837 = vand.u32 %v138, 4294901760
    %v838 = vsub.f32 %v138, %v837
    %v839 = vand.u32 %v838, 4294901760
    %v840 = vsub.f32 %v838, %v839
    %v841 = vand.u32 %v840, 4294901760
    %842 = vmatpush1.msra.mxu0 %v841
    %v843 = vand.u32 %v141, 4294901760
    %v844 = vsub.f32 %v141, %v843
    %v845 = vand.u32 %v844, 4294901760
    %v846 = vsub.f32 %v844, %v845
    %v847 = vand.u32 %v846, 4294901760
    %848 = vmatprep.subr.mxu0 %v847
    %v849 = vand.u32 %v140, 4294901760
    %v850 = vsub.f32 %v140, %v849
    %v851 = vand.u32 %v850, 4294901760
    %v852 = vsub.f32 %v850, %v851
    %v853 = vand.u32 %v852, 4294901760
    %854 = vmatpush1.msra.mxu0 %v853
    %v855 = vand.u32 %v143, 4294901760
    %v856 = vsub.f32 %v143, %v855
    %v857 = vand.u32 %v856, 4294901760
    %v858 = vsub.f32 %v856, %v857
    %v859 = vand.u32 %v858, 4294901760
    %860 = vmatprep.subr.mxu0 %v859
    %v861 = vand.u32 %v142, 4294901760
    %v862 = vsub.f32 %v142, %v861
    %v863 = vand.u32 %v862, 4294901760
    %v864 = vsub.f32 %v862, %v863
    %v865 = vand.u32 %v864, 4294901760
    %866 = vmatpush1.msra.mxu0 %v865
    %v867 = vand.u32 %v145, 4294901760
    %v868 = vsub.f32 %v145, %v867
    %v869 = vand.u32 %v868, 4294901760
    %v870 = vsub.f32 %v868, %v869
    %v871 = vand.u32 %v870, 4294901760
    %872 = vmatprep.subr.mxu0 %v871
    %v873 = vand.u32 %v144, 4294901760
    %v874 = vsub.f32 %v144, %v873
    %v875 = vand.u32 %v874, 4294901760
    %v876 = vsub.f32 %v874, %v875
    %v877 = vand.u32 %v876, 4294901760
    %878 = vmatpush1.msra.mxu0 %v877
    %v879 = vand.u32 %v147, 4294901760
    %v880 = vsub.f32 %v147, %v879
    %v881 = vand.u32 %v880, 4294901760
    %v882 = vsub.f32 %v880, %v881
    %v883 = vand.u32 %v882, 4294901760
    %884 = vmatprep.subr.mxu0 %v883
    %v885 = vand.u32 %v146, 4294901760
    %v886 = vsub.f32 %v146, %v885
    %v887 = vand.u32 %v886, 4294901760
    %v888 = vsub.f32 %v886, %v887
    %v889 = vand.u32 %v888, 4294901760
    %890 = vmatpush1.msra.mxu0 %v889
    %v891 = vand.u32 %v149, 4294901760
    %v892 = vsub.f32 %v149, %v891
    %v893 = vand.u32 %v892, 4294901760
    %v894 = vsub.f32 %v892, %v893
    %v895 = vand.u32 %v894, 4294901760
    %896 = vmatprep.subr.mxu0 %v895
    %v897 = vand.u32 %v148, 4294901760
    %v898 = vsub.f32 %v148, %v897
    %v899 = vand.u32 %v898, 4294901760
    %v900 = vsub.f32 %v898, %v899
    %v901 = vand.u32 %v900, 4294901760
    %902 = vmatpush1.msra.mxu0 %v901
    %v903 = vand.u32 %v57, 4294901760
    %904 = vmatprep.mubr.f32.mxu0 %v903
    %v905 = vand.u32 %v56, 4294901760
    %906 = vmatmul.mubr.f32.gmra.mrb[0].mxu0 %v905
    %v907 = vpop.f32.mrb[0].mxu0
    %v908 = vadd.f32 %v291, %v907
    %v909 = vpop.f32.mrb[0].mxu0
    %v910 = vadd.f32 %v293, %v909
    %v911 = vand.u32 %v59, 4294901760
    %912 = vmatprep.mubr.f32.mxu0 %v911
    %v913 = vand.u32 %v58, 4294901760
    %914 = vmatmul.mubr.f32.gmra.mrb[0].mxu0 %v913
    %v915 = vpop.f32.mrb[0].mxu0
    %v916 = vadd.f32 %v307, %v915
    %v917 = vpop.f32.mrb[0].mxu0
    %v918 = vadd.f32 %v309, %v917
    %v919 = vand.u32 %v61, 4294901760
    %920 = vmatprep.mubr.f32.mxu0 %v919
    %v921 = vand.u32 %v60, 4294901760
    %922 = vmatmul.mubr.f32.gmra.mrb[0].mxu0 %v921
    %v923 = vpop.f32.mrb[0].mxu0
    %v924 = vadd.f32 %v323, %v923
    %v925 = vpop.f32.mrb[0].mxu0
    %v926 = vadd.f32 %v325, %v925
    %v927 = vand.u32 %v63, 4294901760
    %928 = vmatprep.mubr.f32.mxu0 %v927
    %v929 = vand.u32 %v62, 4294901760
    %930 = vmatmul.mubr.f32.gmra.mrb[0].mxu0 %v929
    %v931 = vpop.f32.mrb[0].mxu0
    %v932 = vadd.f32 %v339, %v931
    %v933 = vpop.f32.mrb[0].mxu0
    %v934 = vadd.f32 %v341, %v933
    %v935 = vand.u32 %v65, 4294901760
    %936 = vmatprep.mubr.f32.mxu0 %v935
    %v937 = vand.u32 %v64, 4294901760
    %938 = vmatmul.mubr.f32.gmra.mrb[0].mxu0 %v937
    %v939 = vpop.f32.mrb[0].mxu0
    %v940 = vadd.f32 %v355, %v939
    %v941 = vpop.f32.mrb[0].mxu0
    %v942 = vadd.f32 %v357, %v941
    %v943 = vand.u32 %v67, 4294901760
    %944 = vmatprep.mubr.f32.mxu0 %v943
    %v945 = vand.u32 %v66, 4294901760
    %946 = vmatmul.mubr.f32.gmra.mrb[0].mxu0 %v945
    %v947 = vpop.f32.mrb[0].mxu0
    %v948 = vadd.f32 %v371, %v947
    %v949 = vpop.f32.mrb[0].mxu0
    %v950 = vadd.f32 %v373, %v949
    %v951 = vand.u32 %v69, 4294901760
    %952 = vmatprep.mubr.f32.mxu0 %v951
    %v953 = vand.u32 %v68, 4294901760
    %954 = vmatmul.mubr.f32.gmra.mrb[0].mxu0 %v953
    %v955 = vpop.f32.mrb[0].mxu0
    %v956 = vadd.f32 %v387, %v955
    %v957 = vpop.f32.mrb[0].mxu0
    %v958 = vadd.f32 %v389, %v957
    %v959 = vand.u32 %v71, 4294901760
    %960 = vmatprep.mubr.f32.mxu0 %v959
    %v961 = vand.u32 %v70, 4294901760
    %962 = vmatmul.mubr.f32.gmra.mrb[0].mxu0 %v961
    %v963 = vpop.f32.mrb[0].mxu0
    %v964 = vadd.f32 %v403, %v963
    %v965 = vpop.f32.mrb[0].mxu0
    %v966 = vadd.f32 %v405, %v965
    %v967 = vand.u32 %v73, 4294901760
    %968 = vmatprep.mubr.f32.mxu0 %v967
    %v969 = vand.u32 %v72, 4294901760
    %970 = vmatmul.mubr.f32.gmra.mrb[0].mxu0 %v969
    %v971 = vpop.f32.mrb[0].mxu0
    %v972 = vadd.f32 %v419, %v971
    %v973 = vpop.f32.mrb[0].mxu0
    %v974 = vadd.f32 %v421, %v973
    %v975 = vand.u32 %v75, 4294901760
    %976 = vmatprep.mubr.f32.mxu0 %v975
    %v977 = vand.u32 %v74, 4294901760
    %978 = vmatmul.mubr.f32.gmra.mrb[0].mxu0 %v977
    %v979 = vpop.f32.mrb[0].mxu0
    %v980 = vadd.f32 %v435, %v979
    %v981 = vpop.f32.mrb[0].mxu0
    %v982 = vadd.f32 %v437, %v981
    %v983 = vand.u32 %v77, 4294901760
    %984 = vmatprep.mubr.f32.mxu0 %v983
    %v985 = vand.u32 %v76, 4294901760
    %986 = vmatmul.mubr.f32.gmra.mrb[0].mxu0 %v985
    %v987 = vpop.f32.mrb[0].mxu0
    %v988 = vadd.f32 %v451, %v987
    %v989 = vpop.f32.mrb[0].mxu0
    %v990 = vadd.f32 %v453, %v989
    %v991 = vand.u32 %v79, 4294901760
    %992 = vmatprep.mubr.f32.mxu0 %v991
    %v993 = vand.u32 %v78, 4294901760
    %994 = vmatmul.mubr.f32.gmra.mrb[0].mxu0 %v993
    %v995 = vpop.f32.mrb[0].mxu0
    %v996 = vadd.f32 %v467, %v995
    %v997 = vpop.f32.mrb[0].mxu0
    %v998 = vadd.f32 %v469, %v997
    %v999 = vand.u32 %v81, 4294901760
    %1000 = vmatprep.mubr.f32.mxu0 %v999
    %v1001 = vand.u32 %v80, 4294901760
    %1002 = vmatmul.mubr.f32.gmra.mrb[0].mxu0 %v1001
    %v1003 = vpop.f32.mrb[0].mxu0
    %v1004 = vadd.f32 %v483, %v1003
    %v1005 = vpop.f32.mrb[0].mxu0
    %v1006 = vadd.f32 %v485, %v1005
    %v1007 = vand.u32 %v83, 4294901760
    %1008 = vmatprep.mubr.f32.mxu0 %v1007
    %v1009 = vand.u32 %v82, 4294901760
    %1010 = vmatmul.mubr.f32.gmra.mrb[0].mxu0 %v1009
    %v1011 = vpop.f32.mrb[0].mxu0
    %v1012 = vadd.f32 %v499, %v1011
    %v1013 = vpop.f32.mrb[0].mxu0
    %v1014 = vadd.f32 %v501, %v1013
    %v1015 = vand.u32 %v85, 4294901760
    %1016 = vmatprep.mubr.f32.mxu0 %v1015
    %v1017 = vand.u32 %v84, 4294901760
    %1018 = vmatmul.mubr.f32.gmra.mrb[0].mxu0 %v1017
    %v1019 = vpop.f32.mrb[0].mxu0
    %v1020 = vadd.f32 %v515, %v1019
    %v1021 = vpop.f32.mrb[0].mxu0
    %v1022 = vadd.f32 %v517, %v1021
    %1023 = vdwg.mxu0
    %v1024 = vand.u32 %v87, 4294901760
    %v1025 = vsub.f32 %v87, %v1024
    %1026 = vmatprep.subr.mxu0 %v1025
    %v1027 = vand.u32 %v86, 4294901760
    %v1028 = vsub.f32 %v86, %v1027
    %1029 = vmatpush1.msra.mxu0 %v1028
    %v1030 = vand.u32 %v89, 4294901760
    %v1031 = vsub.f32 %v89, %v1030
    %1032 = vmatprep.subr.mxu0 %v1031
    %v1033 = vand.u32 %v88, 4294901760
    %v1034 = vsub.f32 %v88, %v1033
    %1035 = vmatpush1.msra.mxu0 %v1034
    %v1036 = vand.u32 %v91, 4294901760
    %v1037 = vsub.f32 %v91, %v1036
    %1038 = vmatprep.subr.mxu0 %v1037
    %v1039 = vand.u32 %v90, 4294901760
    %v1040 = vsub.f32 %v90, %v1039
    %1041 = vmatpush1.msra.mxu0 %v1040
    %v1042 = vand.u32 %v93, 4294901760
    %v1043 = vsub.f32 %v93, %v1042
    %1044 = vmatprep.subr.mxu0 %v1043
    %v1045 = vand.u32 %v92, 4294901760
    %v1046 = vsub.f32 %v92, %v1045
    %1047 = vmatpush1.msra.mxu0 %v1046
    %v1048 = vand.u32 %v95, 4294901760
    %v1049 = vsub.f32 %v95, %v1048
    %1050 = vmatprep.subr.mxu0 %v1049
    %v1051 = vand.u32 %v94, 4294901760
    %v1052 = vsub.f32 %v94, %v1051
    %1053 = vmatpush1.msra.mxu0 %v1052
    %v1054 = vand.u32 %v97, 4294901760
    %v1055 = vsub.f32 %v97, %v1054
    %1056 = vmatprep.subr.mxu0 %v1055
    %v1057 = vand.u32 %v96, 4294901760
    %v1058 = vsub.f32 %v96, %v1057
    %1059 = vmatpush1.msra.mxu0 %v1058
    %v1060 = vand.u32 %v99, 4294901760
    %v1061 = vsub.f32 %v99, %v1060
    %1062 = vmatprep.subr.mxu0 %v1061
    %v1063 = vand.u32 %v98, 4294901760
    %v1064 = vsub.f32 %v98, %v1063
    %1065 = vmatpush1.msra.mxu0 %v1064
    %v1066 = vand.u32 %v101, 4294901760
    %v1067 = vsub.f32 %v101, %v1066
    %1068 = vmatprep.subr.mxu0 %v1067
    %v1069 = vand.u32 %v100, 4294901760
    %v1070 = vsub.f32 %v100, %v1069
    %1071 = vmatpush1.msra.mxu0 %v1070
    %v1072 = vand.u32 %v103, 4294901760
    %v1073 = vsub.f32 %v103, %v1072
    %1074 = vmatprep.subr.mxu0 %v1073
    %v1075 = vand.u32 %v102, 4294901760
    %v1076 = vsub.f32 %v102, %v1075
    %1077 = vmatpush1.msra.mxu0 %v1076
    %v1078 = vand.u32 %v105, 4294901760
    %v1079 = vsub.f32 %v105, %v1078
    %1080 = vmatprep.subr.mxu0 %v1079
    %v1081 = vand.u32 %v104, 4294901760
    %v1082 = vsub.f32 %v104, %v1081
    %1083 = vmatpush1.msra.mxu0 %v1082
    %v1084 = vand.u32 %v107, 4294901760
    %v1085 = vsub.f32 %v107, %v1084
    %1086 = vmatprep.subr.mxu0 %v1085
    %v1087 = vand.u32 %v106, 4294901760
    %v1088 = vsub.f32 %v106, %v1087
    %1089 = vmatpush1.msra.mxu0 %v1088
    %v1090 = vand.u32 %v109, 4294901760
    %v1091 = vsub.f32 %v109, %v1090
    %1092 = vmatprep.subr.mxu0 %v1091
    %v1093 = vand.u32 %v108, 4294901760
    %v1094 = vsub.f32 %v108, %v1093
    %1095 = vmatpush1.msra.mxu0 %v1094
    %v1096 = vand.u32 %v111, 4294901760
    %v1097 = vsub.f32 %v111, %v1096
    %1098 = vmatprep.subr.mxu0 %v1097
    %v1099 = vand.u32 %v110, 4294901760
    %v1100 = vsub.f32 %v110, %v1099
    %1101 = vmatpush1.msra.mxu0 %v1100
    %v1102 = vand.u32 %v113, 4294901760
    %v1103 = vsub.f32 %v113, %v1102
    %1104 = vmatprep.subr.mxu0 %v1103
    %v1105 = vand.u32 %v112, 4294901760
    %v1106 = vsub.f32 %v112, %v1105
    %1107 = vmatpush1.msra.mxu0 %v1106
    %v1108 = vand.u32 %v115, 4294901760
    %v1109 = vsub.f32 %v115, %v1108
    %1110 = vmatprep.subr.mxu0 %v1109
    %v1111 = vand.u32 %v114, 4294901760
    %v1112 = vsub.f32 %v114, %v1111
    %1113 = vmatpush1.msra.mxu0 %v1112
    %v1114 = vand.u32 %v117, 4294901760
    %v1115 = vsub.f32 %v117, %v1114
    %1116 = vmatprep.subr.mxu0 %v1115
    %v1117 = vand.u32 %v116, 4294901760
    %v1118 = vsub.f32 %v116, %v1117
    %1119 = vmatpush1.msra.mxu0 %v1118
    %v1120 = vand.u32 %v119, 4294901760
    %v1121 = vsub.f32 %v119, %v1120
    %1122 = vmatprep.subr.mxu0 %v1121
    %v1123 = vand.u32 %v118, 4294901760
    %v1124 = vsub.f32 %v118, %v1123
    %1125 = vmatpush1.msra.mxu0 %v1124
    %v1126 = vand.u32 %v121, 4294901760
    %v1127 = vsub.f32 %v121, %v1126
    %1128 = vmatprep.subr.mxu0 %v1127
    %v1129 = vand.u32 %v120, 4294901760
    %v1130 = vsub.f32 %v120, %v1129
    %1131 = vmatpush1.msra.mxu0 %v1130
    %v1132 = vand.u32 %v123, 4294901760
    %v1133 = vsub.f32 %v123, %v1132
    %1134 = vmatprep.subr.mxu0 %v1133
    %v1135 = vand.u32 %v122, 4294901760
    %v1136 = vsub.f32 %v122, %v1135
    %1137 = vmatpush1.msra.mxu0 %v1136
    %v1138 = vand.u32 %v125, 4294901760
    %v1139 = vsub.f32 %v125, %v1138
    %1140 = vmatprep.subr.mxu0 %v1139
    %v1141 = vand.u32 %v124, 4294901760
    %v1142 = vsub.f32 %v124, %v1141
    %1143 = vmatpush1.msra.mxu0 %v1142
    %v1144 = vand.u32 %v127, 4294901760
    %v1145 = vsub.f32 %v127, %v1144
    %1146 = vmatprep.subr.mxu0 %v1145
    %v1147 = vand.u32 %v126, 4294901760
    %v1148 = vsub.f32 %v126, %v1147
    %1149 = vmatpush1.msra.mxu0 %v1148
    %v1150 = vand.u32 %v129, 4294901760
    %v1151 = vsub.f32 %v129, %v1150
    %1152 = vmatprep.subr.mxu0 %v1151
    %v1153 = vand.u32 %v128, 4294901760
    %v1154 = vsub.f32 %v128, %v1153
    %1155 = vmatpush1.msra.mxu0 %v1154
    %v1156 = vand.u32 %v131, 4294901760
    %v1157 = vsub.f32 %v131, %v1156
    %1158 = vmatprep.subr.mxu0 %v1157
    %v1159 = vand.u32 %v130, 4294901760
    %v1160 = vsub.f32 %v130, %v1159
    %1161 = vmatpush1.msra.mxu0 %v1160
    %v1162 = vand.u32 %v133, 4294901760
    %v1163 = vsub.f32 %v133, %v1162
    %1164 = vmatprep.subr.mxu0 %v1163
    %v1165 = vand.u32 %v132, 4294901760
    %v1166 = vsub.f32 %v132, %v1165
    %1167 = vmatpush1.msra.mxu0 %v1166
    %v1168 = vand.u32 %v135, 4294901760
    %v1169 = vsub.f32 %v135, %v1168
    %1170 = vmatprep.subr.mxu0 %v1169
    %v1171 = vand.u32 %v134, 4294901760
    %v1172 = vsub.f32 %v134, %v1171
    %1173 = vmatpush1.msra.mxu0 %v1172
    %v1174 = vand.u32 %v137, 4294901760
    %v1175 = vsub.f32 %v137, %v1174
    %1176 = vmatprep.subr.mxu0 %v1175
    %v1177 = vand.u32 %v136, 4294901760
    %v1178 = vsub.f32 %v136, %v1177
    %1179 = vmatpush1.msra.mxu0 %v1178
    %v1180 = vand.u32 %v139, 4294901760
    %v1181 = vsub.f32 %v139, %v1180
    %1182 = vmatprep.subr.mxu0 %v1181
    %v1183 = vand.u32 %v138, 4294901760
    %v1184 = vsub.f32 %v138, %v1183
    %1185 = vmatpush1.msra.mxu0 %v1184
    %v1186 = vand.u32 %v141, 4294901760
    %v1187 = vsub.f32 %v141, %v1186
    %1188 = vmatprep.subr.mxu0 %v1187
    %v1189 = vand.u32 %v140, 4294901760
    %v1190 = vsub.f32 %v140, %v1189
    %1191 = vmatpush1.msra.mxu0 %v1190
    %v1192 = vand.u32 %v143, 4294901760
    %v1193 = vsub.f32 %v143, %v1192
    %1194 = vmatprep.subr.mxu0 %v1193
    %v1195 = vand.u32 %v142, 4294901760
    %v1196 = vsub.f32 %v142, %v1195
    %1197 = vmatpush1.msra.mxu0 %v1196
    %v1198 = vand.u32 %v145, 4294901760
    %v1199 = vsub.f32 %v145, %v1198
    %1200 = vmatprep.subr.mxu0 %v1199
    %v1201 = vand.u32 %v144, 4294901760
    %v1202 = vsub.f32 %v144, %v1201
    %1203 = vmatpush1.msra.mxu0 %v1202
    %v1204 = vand.u32 %v147, 4294901760
    %v1205 = vsub.f32 %v147, %v1204
    %1206 = vmatprep.subr.mxu0 %v1205
    %v1207 = vand.u32 %v146, 4294901760
    %v1208 = vsub.f32 %v146, %v1207
    %1209 = vmatpush1.msra.mxu0 %v1208
    %v1210 = vand.u32 %v149, 4294901760
    %v1211 = vsub.f32 %v149, %v1210
    %1212 = vmatprep.subr.mxu0 %v1211
    %v1213 = vand.u32 %v148, 4294901760
    %v1214 = vsub.f32 %v148, %v1213
    %1215 = vmatpush1.msra.mxu0 %v1214
    %v1216 = vand.u32 %v57, 4294901760
    %v1217 = vsub.f32 %v57, %v1216
    %1218 = vmatprep.mubr.f32.mxu0 %v1217
    %v1219 = vand.u32 %v56, 4294901760
    %v1220 = vsub.f32 %v56, %v1219
    %1221 = vmatmul.mubr.f32.gmra.mrb[0].mxu0 %v1220
    %v1222 = vpop.f32.mrb[0].mxu0
    %v1223 = vadd.f32 %v908, %v1222
    %v1224 = vpop.f32.mrb[0].mxu0
    %v1225 = vadd.f32 %v910, %v1224
    %v1226 = vand.u32 %v59, 4294901760
    %v1227 = vsub.f32 %v59, %v1226
    %1228 = vmatprep.mubr.f32.mxu0 %v1227
    %v1229 = vand.u32 %v58, 4294901760
    %v1230 = vsub.f32 %v58, %v1229
    %1231 = vmatmul.mubr.f32.gmra.mrb[0].mxu0 %v1230
    %v1232 = vpop.f32.mrb[0].mxu0
    %v1233 = vadd.f32 %v916, %v1232
    %v1234 = vpop.f32.mrb[0].mxu0
    %v1235 = vadd.f32 %v918, %v1234
    %v1236 = vand.u32 %v61, 4294901760
    %v1237 = vsub.f32 %v61, %v1236
    %1238 = vmatprep.mubr.f32.mxu0 %v1237
    %v1239 = vand.u32 %v60, 4294901760
    %v1240 = vsub.f32 %v60, %v1239
    %1241 = vmatmul.mubr.f32.gmra.mrb[0].mxu0 %v1240
    %v1242 = vpop.f32.mrb[0].mxu0
    %v1243 = vadd.f32 %v924, %v1242
    %v1244 = vpop.f32.mrb[0].mxu0
    %v1245 = vadd.f32 %v926, %v1244
    %v1246 = vand.u32 %v63, 4294901760
    %v1247 = vsub.f32 %v63, %v1246
    %1248 = vmatprep.mubr.f32.mxu0 %v1247
    %v1249 = vand.u32 %v62, 4294901760
    %v1250 = vsub.f32 %v62, %v1249
    %1251 = vmatmul.mubr.f32.gmra.mrb[0].mxu0 %v1250
    %v1252 = vpop.f32.mrb[0].mxu0
    %v1253 = vadd.f32 %v932, %v1252
    %v1254 = vpop.f32.mrb[0].mxu0
    %v1255 = vadd.f32 %v934, %v1254
    %v1256 = vand.u32 %v65, 4294901760
    %v1257 = vsub.f32 %v65, %v1256
    %1258 = vmatprep.mubr.f32.mxu0 %v1257
    %v1259 = vand.u32 %v64, 4294901760
    %v1260 = vsub.f32 %v64, %v1259
    %1261 = vmatmul.mubr.f32.gmra.mrb[0].mxu0 %v1260
    %v1262 = vpop.f32.mrb[0].mxu0
    %v1263 = vadd.f32 %v940, %v1262
    %v1264 = vpop.f32.mrb[0].mxu0
    %v1265 = vadd.f32 %v942, %v1264
    %v1266 = vand.u32 %v67, 4294901760
    %v1267 = vsub.f32 %v67, %v1266
    %1268 = vmatprep.mubr.f32.mxu0 %v1267
    %v1269 = vand.u32 %v66, 4294901760
    %v1270 = vsub.f32 %v66, %v1269
    %1271 = vmatmul.mubr.f32.gmra.mrb[0].mxu0 %v1270
    %v1272 = vpop.f32.mrb[0].mxu0
    %v1273 = vadd.f32 %v948, %v1272
    %v1274 = vpop.f32.mrb[0].mxu0
    %v1275 = vadd.f32 %v950, %v1274
    %v1276 = vand.u32 %v69, 4294901760
    %v1277 = vsub.f32 %v69, %v1276
    %1278 = vmatprep.mubr.f32.mxu0 %v1277
    %v1279 = vand.u32 %v68, 4294901760
    %v1280 = vsub.f32 %v68, %v1279
    %1281 = vmatmul.mubr.f32.gmra.mrb[0].mxu0 %v1280
    %v1282 = vpop.f32.mrb[0].mxu0
    %v1283 = vadd.f32 %v956, %v1282
    %v1284 = vpop.f32.mrb[0].mxu0
    %v1285 = vadd.f32 %v958, %v1284
    %v1286 = vand.u32 %v71, 4294901760
    %v1287 = vsub.f32 %v71, %v1286
    %1288 = vmatprep.mubr.f32.mxu0 %v1287
    %v1289 = vand.u32 %v70, 4294901760
    %v1290 = vsub.f32 %v70, %v1289
    %1291 = vmatmul.mubr.f32.gmra.mrb[0].mxu0 %v1290
    %v1292 = vpop.f32.mrb[0].mxu0
    %v1293 = vadd.f32 %v964, %v1292
    %v1294 = vpop.f32.mrb[0].mxu0
    %v1295 = vadd.f32 %v966, %v1294
    %v1296 = vand.u32 %v73, 4294901760
    %v1297 = vsub.f32 %v73, %v1296
    %1298 = vmatprep.mubr.f32.mxu0 %v1297
    %v1299 = vand.u32 %v72, 4294901760
    %v1300 = vsub.f32 %v72, %v1299
    %1301 = vmatmul.mubr.f32.gmra.mrb[0].mxu0 %v1300
    %v1302 = vpop.f32.mrb[0].mxu0
    %v1303 = vadd.f32 %v972, %v1302
    %v1304 = vpop.f32.mrb[0].mxu0
    %v1305 = vadd.f32 %v974, %v1304
    %v1306 = vand.u32 %v75, 4294901760
    %v1307 = vsub.f32 %v75, %v1306
    %1308 = vmatprep.mubr.f32.mxu0 %v1307
    %v1309 = vand.u32 %v74, 4294901760
    %v1310 = vsub.f32 %v74, %v1309
    %1311 = vmatmul.mubr.f32.gmra.mrb[0].mxu0 %v1310
    %v1312 = vpop.f32.mrb[0].mxu0
    %v1313 = vadd.f32 %v980, %v1312
    %v1314 = vpop.f32.mrb[0].mxu0
    %v1315 = vadd.f32 %v982, %v1314
    %v1316 = vand.u32 %v77, 4294901760
    %v1317 = vsub.f32 %v77, %v1316
    %1318 = vmatprep.mubr.f32.mxu0 %v1317
    %v1319 = vand.u32 %v76, 4294901760
    %v1320 = vsub.f32 %v76, %v1319
    %1321 = vmatmul.mubr.f32.gmra.mrb[0].mxu0 %v1320
    %v1322 = vpop.f32.mrb[0].mxu0
    %v1323 = vadd.f32 %v988, %v1322
    %v1324 = vpop.f32.mrb[0].mxu0
    %v1325 = vadd.f32 %v990, %v1324
    %v1326 = vand.u32 %v79, 4294901760
    %v1327 = vsub.f32 %v79, %v1326
    %1328 = vmatprep.mubr.f32.mxu0 %v1327
    %v1329 = vand.u32 %v78, 4294901760
    %v1330 = vsub.f32 %v78, %v1329
    %1331 = vmatmul.mubr.f32.gmra.mrb[0].mxu0 %v1330
    %v1332 = vpop.f32.mrb[0].mxu0
    %v1333 = vadd.f32 %v996, %v1332
    %v1334 = vpop.f32.mrb[0].mxu0
    %v1335 = vadd.f32 %v998, %v1334
    %v1336 = vand.u32 %v81, 4294901760
    %v1337 = vsub.f32 %v81, %v1336
    %1338 = vmatprep.mubr.f32.mxu0 %v1337
    %v1339 = vand.u32 %v80, 4294901760
    %v1340 = vsub.f32 %v80, %v1339
    %1341 = vmatmul.mubr.f32.gmra.mrb[0].mxu0 %v1340
    %v1342 = vpop.f32.mrb[0].mxu0
    %v1343 = vadd.f32 %v1004, %v1342
    %v1344 = vpop.f32.mrb[0].mxu0
    %v1345 = vadd.f32 %v1006, %v1344
    %v1346 = vand.u32 %v83, 4294901760
    %v1347 = vsub.f32 %v83, %v1346
    %1348 = vmatprep.mubr.f32.mxu0 %v1347
    %v1349 = vand.u32 %v82, 4294901760
    %v1350 = vsub.f32 %v82, %v1349
    %1351 = vmatmul.mubr.f32.gmra.mrb[0].mxu0 %v1350
    %v1352 = vpop.f32.mrb[0].mxu0
    %v1353 = vadd.f32 %v1012, %v1352
    %v1354 = vpop.f32.mrb[0].mxu0
    %v1355 = vadd.f32 %v1014, %v1354
    %v1356 = vand.u32 %v85, 4294901760
    %v1357 = vsub.f32 %v85, %v1356
    %1358 = vmatprep.mubr.f32.mxu0 %v1357
    %v1359 = vand.u32 %v84, 4294901760
    %v1360 = vsub.f32 %v84, %v1359
    %1361 = vmatmul.mubr.f32.gmra.mrb[0].mxu0 %v1360
    %v1362 = vpop.f32.mrb[0].mxu0
    %v1363 = vadd.f32 %v1020, %v1362
    %v1364 = vpop.f32.mrb[0].mxu0
    %v1365 = vadd.f32 %v1022, %v1364
    %1366 = vdwg.mxu0
    %v1367 = vand.u32 %v87, 4294901760
    %1368 = vmatprep.subr.mxu0 %v1367
    %v1369 = vand.u32 %v86, 4294901760
    %1370 = vmatpush1.msra.mxu0 %v1369
    %v1371 = vand.u32 %v89, 4294901760
    %1372 = vmatprep.subr.mxu0 %v1371
    %v1373 = vand.u32 %v88, 4294901760
    %1374 = vmatpush1.msra.mxu0 %v1373
    %v1375 = vand.u32 %v91, 4294901760
    %1376 = vmatprep.subr.mxu0 %v1375
    %v1377 = vand.u32 %v90, 4294901760
    %1378 = vmatpush1.msra.mxu0 %v1377
    %v1379 = vand.u32 %v93, 4294901760
    %1380 = vmatprep.subr.mxu0 %v1379
    %v1381 = vand.u32 %v92, 4294901760
    %1382 = vmatpush1.msra.mxu0 %v1381
    %v1383 = vand.u32 %v95, 4294901760
    %1384 = vmatprep.subr.mxu0 %v1383
    %v1385 = vand.u32 %v94, 4294901760
    %1386 = vmatpush1.msra.mxu0 %v1385
    %v1387 = vand.u32 %v97, 4294901760
    %1388 = vmatprep.subr.mxu0 %v1387
    %v1389 = vand.u32 %v96, 4294901760
    %1390 = vmatpush1.msra.mxu0 %v1389
    %v1391 = vand.u32 %v99, 4294901760
    %1392 = vmatprep.subr.mxu0 %v1391
    %v1393 = vand.u32 %v98, 4294901760
    %1394 = vmatpush1.msra.mxu0 %v1393
    %v1395 = vand.u32 %v101, 4294901760
    %1396 = vmatprep.subr.mxu0 %v1395
    %v1397 = vand.u32 %v100, 4294901760
    %1398 = vmatpush1.msra.mxu0 %v1397
    %v1399 = vand.u32 %v103, 4294901760
    %1400 = vmatprep.subr.mxu0 %v1399
    %v1401 = vand.u32 %v102, 4294901760
    %1402 = vmatpush1.msra.mxu0 %v1401
    %v1403 = vand.u32 %v105, 4294901760
    %1404 = vmatprep.subr.mxu0 %v1403
    %v1405 = vand.u32 %v104, 4294901760
    %1406 = vmatpush1.msra.mxu0 %v1405
    %v1407 = vand.u32 %v107, 4294901760
    %1408 = vmatprep.subr.mxu0 %v1407
    %v1409 = vand.u32 %v106, 4294901760
    %1410 = vmatpush1.msra.mxu0 %v1409
    %v1411 = vand.u32 %v109, 4294901760
    %1412 = vmatprep.subr.mxu0 %v1411
    %v1413 = vand.u32 %v108, 4294901760
    %1414 = vmatpush1.msra.mxu0 %v1413
    %v1415 = vand.u32 %v111, 4294901760
    %1416 = vmatprep.subr.mxu0 %v1415
    %v1417 = vand.u32 %v110, 4294901760
    %1418 = vmatpush1.msra.mxu0 %v1417
    %v1419 = vand.u32 %v113, 4294901760
    %1420 = vmatprep.subr.mxu0 %v1419
    %v1421 = vand.u32 %v112, 4294901760
    %1422 = vmatpush1.msra.mxu0 %v1421
    %v1423 = vand.u32 %v115, 4294901760
    %1424 = vmatprep.subr.mxu0 %v1423
    %v1425 = vand.u32 %v114, 4294901760
    %1426 = vmatpush1.msra.mxu0 %v1425
    %v1427 = vand.u32 %v117, 4294901760
    %1428 = vmatprep.subr.mxu0 %v1427
    %v1429 = vand.u32 %v116, 4294901760
    %1430 = vmatpush1.msra.mxu0 %v1429
    %v1431 = vand.u32 %v119, 4294901760
    %1432 = vmatprep.subr.mxu0 %v1431
    %v1433 = vand.u32 %v118, 4294901760
    %1434 = vmatpush1.msra.mxu0 %v1433
    %v1435 = vand.u32 %v121, 4294901760
    %1436 = vmatprep.subr.mxu0 %v1435
    %v1437 = vand.u32 %v120, 4294901760
    %1438 = vmatpush1.msra.mxu0 %v1437
    %v1439 = vand.u32 %v123, 4294901760
    %1440 = vmatprep.subr.mxu0 %v1439
    %v1441 = vand.u32 %v122, 4294901760
    %1442 = vmatpush1.msra.mxu0 %v1441
    %v1443 = vand.u32 %v125, 4294901760
    %1444 = vmatprep.subr.mxu0 %v1443
    %v1445 = vand.u32 %v124, 4294901760
    %1446 = vmatpush1.msra.mxu0 %v1445
    %v1447 = vand.u32 %v127, 4294901760
    %1448 = vmatprep.subr.mxu0 %v1447
    %v1449 = vand.u32 %v126, 4294901760
    %1450 = vmatpush1.msra.mxu0 %v1449
    %v1451 = vand.u32 %v129, 4294901760
    %1452 = vmatprep.subr.mxu0 %v1451
    %v1453 = vand.u32 %v128, 4294901760
    %1454 = vmatpush1.msra.mxu0 %v1453
    %v1455 = vand.u32 %v131, 4294901760
    %1456 = vmatprep.subr.mxu0 %v1455
    %v1457 = vand.u32 %v130, 4294901760
    %1458 = vmatpush1.msra.mxu0 %v1457
    %v1459 = vand.u32 %v133, 4294901760
    %1460 = vmatprep.subr.mxu0 %v1459
    %v1461 = vand.u32 %v132, 4294901760
    %1462 = vmatpush1.msra.mxu0 %v1461
    %v1463 = vand.u32 %v135, 4294901760
    %1464 = vmatprep.subr.mxu0 %v1463
    %v1465 = vand.u32 %v134, 4294901760
    %1466 = vmatpush1.msra.mxu0 %v1465
    %v1467 = vand.u32 %v137, 4294901760
    %1468 = vmatprep.subr.mxu0 %v1467
    %v1469 = vand.u32 %v136, 4294901760
    %1470 = vmatpush1.msra.mxu0 %v1469
    %v1471 = vand.u32 %v139, 4294901760
    %1472 = vmatprep.subr.mxu0 %v1471
    %v1473 = vand.u32 %v138, 4294901760
    %1474 = vmatpush1.msra.mxu0 %v1473
    %v1475 = vand.u32 %v141, 4294901760
    %1476 = vmatprep.subr.mxu0 %v1475
    %v1477 = vand.u32 %v140, 4294901760
    %1478 = vmatpush1.msra.mxu0 %v1477
    %v1479 = vand.u32 %v143, 4294901760
    %1480 = vmatprep.subr.mxu0 %v1479
    %v1481 = vand.u32 %v142, 4294901760
    %1482 = vmatpush1.msra.mxu0 %v1481
    %v1483 = vand.u32 %v145, 4294901760
    %1484 = vmatprep.subr.mxu0 %v1483
    %v1485 = vand.u32 %v144, 4294901760
    %1486 = vmatpush1.msra.mxu0 %v1485
    %v1487 = vand.u32 %v147, 4294901760
    %1488 = vmatprep.subr.mxu0 %v1487
    %v1489 = vand.u32 %v146, 4294901760
    %1490 = vmatpush1.msra.mxu0 %v1489
    %v1491 = vand.u32 %v149, 4294901760
    %1492 = vmatprep.subr.mxu0 %v1491
    %v1493 = vand.u32 %v148, 4294901760
    %1494 = vmatpush1.msra.mxu0 %v1493
    %v1495 = vand.u32 %v57, 4294901760
    %v1496 = vsub.f32 %v57, %v1495
    %v1497 = vand.u32 %v1496, 4294901760
    %1498 = vmatprep.mubr.f32.mxu0 %v1497
    %v1499 = vand.u32 %v56, 4294901760
    %v1500 = vsub.f32 %v56, %v1499
    %v1501 = vand.u32 %v1500, 4294901760
    %1502 = vmatmul.mubr.f32.gmra.mrb[0].mxu0 %v1501
    %v1503 = vpop.f32.mrb[0].mxu0
    %v1504 = vadd.f32 %v1223, %v1503
    %v1505 = vpop.f32.mrb[0].mxu0
    %v1506 = vadd.f32 %v1225, %v1505
    %v1507 = vand.u32 %v59, 4294901760
    %v1508 = vsub.f32 %v59, %v1507
    %v1509 = vand.u32 %v1508, 4294901760
    %1510 = vmatprep.mubr.f32.mxu0 %v1509
    %v1511 = vand.u32 %v58, 4294901760
    %v1512 = vsub.f32 %v58, %v1511
    %v1513 = vand.u32 %v1512, 4294901760
    %1514 = vmatmul.mubr.f32.gmra.mrb[0].mxu0 %v1513
    %v1515 = vpop.f32.mrb[0].mxu0
    %v1516 = vadd.f32 %v1233, %v1515
    %v1517 = vpop.f32.mrb[0].mxu0
    %v1518 = vadd.f32 %v1235, %v1517
    %v1519 = vand.u32 %v61, 4294901760
    %v1520 = vsub.f32 %v61, %v1519
    %v1521 = vand.u32 %v1520, 4294901760
    %1522 = vmatprep.mubr.f32.mxu0 %v1521
    %v1523 = vand.u32 %v60, 4294901760
    %v1524 = vsub.f32 %v60, %v1523
    %v1525 = vand.u32 %v1524, 4294901760
    %1526 = vmatmul.mubr.f32.gmra.mrb[0].mxu0 %v1525
    %v1527 = vpop.f32.mrb[0].mxu0
    %v1528 = vadd.f32 %v1243, %v1527
    %v1529 = vpop.f32.mrb[0].mxu0
    %v1530 = vadd.f32 %v1245, %v1529
    %v1531 = vand.u32 %v63, 4294901760
    %v1532 = vsub.f32 %v63, %v1531
    %v1533 = vand.u32 %v1532, 4294901760
    %1534 = vmatprep.mubr.f32.mxu0 %v1533
    %v1535 = vand.u32 %v62, 4294901760
    %v1536 = vsub.f32 %v62, %v1535
    %v1537 = vand.u32 %v1536, 4294901760
    %1538 = vmatmul.mubr.f32.gmra.mrb[0].mxu0 %v1537
    %v1539 = vpop.f32.mrb[0].mxu0
    %v1540 = vadd.f32 %v1253, %v1539
    %v1541 = vpop.f32.mrb[0].mxu0
    %v1542 = vadd.f32 %v1255, %v1541
    %v1543 = vand.u32 %v65, 4294901760
    %v1544 = vsub.f32 %v65, %v1543
    %v1545 = vand.u32 %v1544, 4294901760
    %1546 = vmatprep.mubr.f32.mxu0 %v1545
    %v1547 = vand.u32 %v64, 4294901760
    %v1548 = vsub.f32 %v64, %v1547
    %v1549 = vand.u32 %v1548, 4294901760
    %1550 = vmatmul.mubr.f32.gmra.mrb[0].mxu0 %v1549
    %v1551 = vpop.f32.mrb[0].mxu0
    %v1552 = vadd.f32 %v1263, %v1551
    %v1553 = vpop.f32.mrb[0].mxu0
    %v1554 = vadd.f32 %v1265, %v1553
    %v1555 = vand.u32 %v67, 4294901760
    %v1556 = vsub.f32 %v67, %v1555
    %v1557 = vand.u32 %v1556, 4294901760
    %1558 = vmatprep.mubr.f32.mxu0 %v1557
    %v1559 = vand.u32 %v66, 4294901760
    %v1560 = vsub.f32 %v66, %v1559
    %v1561 = vand.u32 %v1560, 4294901760
    %1562 = vmatmul.mubr.f32.gmra.mrb[0].mxu0 %v1561
    %v1563 = vpop.f32.mrb[0].mxu0
    %v1564 = vadd.f32 %v1273, %v1563
    %v1565 = vpop.f32.mrb[0].mxu0
    %v1566 = vadd.f32 %v1275, %v1565
    %v1567 = vand.u32 %v69, 4294901760
    %v1568 = vsub.f32 %v69, %v1567
    %v1569 = vand.u32 %v1568, 4294901760
    %1570 = vmatprep.mubr.f32.mxu0 %v1569
    %v1571 = vand.u32 %v68, 4294901760
    %v1572 = vsub.f32 %v68, %v1571
    %v1573 = vand.u32 %v1572, 4294901760
    %1574 = vmatmul.mubr.f32.gmra.mrb[0].mxu0 %v1573
    %v1575 = vpop.f32.mrb[0].mxu0
    %v1576 = vadd.f32 %v1283, %v1575
    %v1577 = vpop.f32.mrb[0].mxu0
    %v1578 = vadd.f32 %v1285, %v1577
    %v1579 = vand.u32 %v71, 4294901760
    %v1580 = vsub.f32 %v71, %v1579
    %v1581 = vand.u32 %v1580, 4294901760
    %1582 = vmatprep.mubr.f32.mxu0 %v1581
    %v1583 = vand.u32 %v70, 4294901760
    %v1584 = vsub.f32 %v70, %v1583
    %v1585 = vand.u32 %v1584, 4294901760
    %1586 = vmatmul.mubr.f32.gmra.mrb[0].mxu0 %v1585
    %v1587 = vpop.f32.mrb[0].mxu0
    %v1588 = vadd.f32 %v1293, %v1587
    %v1589 = vpop.f32.mrb[0].mxu0
    %v1590 = vadd.f32 %v1295, %v1589
    %v1591 = vand.u32 %v73, 4294901760
    %v1592 = vsub.f32 %v73, %v1591
    %v1593 = vand.u32 %v1592, 4294901760
    %1594 = vmatprep.mubr.f32.mxu0 %v1593
    %v1595 = vand.u32 %v72, 4294901760
    %v1596 = vsub.f32 %v72, %v1595
    %v1597 = vand.u32 %v1596, 4294901760
    %1598 = vmatmul.mubr.f32.gmra.mrb[0].mxu0 %v1597
    %v1599 = vpop.f32.mrb[0].mxu0
    %v1600 = vadd.f32 %v1303, %v1599
    %v1601 = vpop.f32.mrb[0].mxu0
    %v1602 = vadd.f32 %v1305, %v1601
    %v1603 = vand.u32 %v75, 4294901760
    %v1604 = vsub.f32 %v75, %v1603
    %v1605 = vand.u32 %v1604, 4294901760
    %1606 = vmatprep.mubr.f32.mxu0 %v1605
    %v1607 = vand.u32 %v74, 4294901760
    %v1608 = vsub.f32 %v74, %v1607
    %v1609 = vand.u32 %v1608, 4294901760
    %1610 = vmatmul.mubr.f32.gmra.mrb[0].mxu0 %v1609
    %v1611 = vpop.f32.mrb[0].mxu0
    %v1612 = vadd.f32 %v1313, %v1611
    %v1613 = vpop.f32.mrb[0].mxu0
    %v1614 = vadd.f32 %v1315, %v1613
    %v1615 = vand.u32 %v77, 4294901760
    %v1616 = vsub.f32 %v77, %v1615
    %v1617 = vand.u32 %v1616, 4294901760
    %1618 = vmatprep.mubr.f32.mxu0 %v1617
    %v1619 = vand.u32 %v76, 4294901760
    %v1620 = vsub.f32 %v76, %v1619
    %v1621 = vand.u32 %v1620, 4294901760
    %1622 = vmatmul.mubr.f32.gmra.mrb[0].mxu0 %v1621
    %v1623 = vpop.f32.mrb[0].mxu0
    %v1624 = vadd.f32 %v1323, %v1623
    %v1625 = vpop.f32.mrb[0].mxu0
    %v1626 = vadd.f32 %v1325, %v1625
    %v1627 = vand.u32 %v79, 4294901760
    %v1628 = vsub.f32 %v79, %v1627
    %v1629 = vand.u32 %v1628, 4294901760
    %1630 = vmatprep.mubr.f32.mxu0 %v1629
    %v1631 = vand.u32 %v78, 4294901760
    %v1632 = vsub.f32 %v78, %v1631
    %v1633 = vand.u32 %v1632, 4294901760
    %1634 = vmatmul.mubr.f32.gmra.mrb[0].mxu0 %v1633
    %v1635 = vpop.f32.mrb[0].mxu0
    %v1636 = vadd.f32 %v1333, %v1635
    %v1637 = vpop.f32.mrb[0].mxu0
    %v1638 = vadd.f32 %v1335, %v1637
    %v1639 = vand.u32 %v81, 4294901760
    %v1640 = vsub.f32 %v81, %v1639
    %v1641 = vand.u32 %v1640, 4294901760
    %1642 = vmatprep.mubr.f32.mxu0 %v1641
    %v1643 = vand.u32 %v80, 4294901760
    %v1644 = vsub.f32 %v80, %v1643
    %v1645 = vand.u32 %v1644, 4294901760
    %1646 = vmatmul.mubr.f32.gmra.mrb[0].mxu0 %v1645
    %v1647 = vpop.f32.mrb[0].mxu0
    %v1648 = vadd.f32 %v1343, %v1647
    %v1649 = vpop.f32.mrb[0].mxu0
    %v1650 = vadd.f32 %v1345, %v1649
    %v1651 = vand.u32 %v83, 4294901760
    %v1652 = vsub.f32 %v83, %v1651
    %v1653 = vand.u32 %v1652, 4294901760
    %1654 = vmatprep.mubr.f32.mxu0 %v1653
    %v1655 = vand.u32 %v82, 4294901760
    %v1656 = vsub.f32 %v82, %v1655
    %v1657 = vand.u32 %v1656, 4294901760
    %1658 = vmatmul.mubr.f32.gmra.mrb[0].mxu0 %v1657
    %v1659 = vpop.f32.mrb[0].mxu0
    %v1660 = vadd.f32 %v1353, %v1659
    %v1661 = vpop.f32.mrb[0].mxu0
    %v1662 = vadd.f32 %v1355, %v1661
    %v1663 = vand.u32 %v85, 4294901760
    %v1664 = vsub.f32 %v85, %v1663
    %v1665 = vand.u32 %v1664, 4294901760
    %1666 = vmatprep.mubr.f32.mxu0 %v1665
    %v1667 = vand.u32 %v84, 4294901760
    %v1668 = vsub.f32 %v84, %v1667
    %v1669 = vand.u32 %v1668, 4294901760
    %1670 = vmatmul.mubr.f32.gmra.mrb[0].mxu0 %v1669
    %v1671 = vpop.f32.mrb[0].mxu0
    %v1672 = vadd.f32 %v1363, %v1671
    %v1673 = vpop.f32.mrb[0].mxu0
    %v1674 = vadd.f32 %v1365, %v1673
    %1675 = vdwg.mxu0
    %v1676 = vand.u32 %v87, 4294901760
    %v1677 = vsub.f32 %v87, %v1676
    %v1678 = vand.u32 %v1677, 4294901760
    %1679 = vmatprep.subr.mxu0 %v1678
    %v1680 = vand.u32 %v86, 4294901760
    %v1681 = vsub.f32 %v86, %v1680
    %v1682 = vand.u32 %v1681, 4294901760
    %1683 = vmatpush1.msra.mxu0 %v1682
    %v1684 = vand.u32 %v89, 4294901760
    %v1685 = vsub.f32 %v89, %v1684
    %v1686 = vand.u32 %v1685, 4294901760
    %1687 = vmatprep.subr.mxu0 %v1686
    %v1688 = vand.u32 %v88, 4294901760
    %v1689 = vsub.f32 %v88, %v1688
    %v1690 = vand.u32 %v1689, 4294901760
    %1691 = vmatpush1.msra.mxu0 %v1690
    %v1692 = vand.u32 %v91, 4294901760
    %v1693 = vsub.f32 %v91, %v1692
    %v1694 = vand.u32 %v1693, 4294901760
    %1695 = vmatprep.subr.mxu0 %v1694
    %v1696 = vand.u32 %v90, 4294901760
    %v1697 = vsub.f32 %v90, %v1696
    %v1698 = vand.u32 %v1697, 4294901760
    %1699 = vmatpush1.msra.mxu0 %v1698
    %v1700 = vand.u32 %v93, 4294901760
    %v1701 = vsub.f32 %v93, %v1700
    %v1702 = vand.u32 %v1701, 4294901760
    %1703 = vmatprep.subr.mxu0 %v1702
    %v1704 = vand.u32 %v92, 4294901760
    %v1705 = vsub.f32 %v92, %v1704
    %v1706 = vand.u32 %v1705, 4294901760
    %1707 = vmatpush1.msra.mxu0 %v1706
    %v1708 = vand.u32 %v95, 4294901760
    %v1709 = vsub.f32 %v95, %v1708
    %v1710 = vand.u32 %v1709, 4294901760
    %1711 = vmatprep.subr.mxu0 %v1710
    %v1712 = vand.u32 %v94, 4294901760
    %v1713 = vsub.f32 %v94, %v1712
    %v1714 = vand.u32 %v1713, 4294901760
    %1715 = vmatpush1.msra.mxu0 %v1714
    %v1716 = vand.u32 %v97, 4294901760
    %v1717 = vsub.f32 %v97, %v1716
    %v1718 = vand.u32 %v1717, 4294901760
    %1719 = vmatprep.subr.mxu0 %v1718
    %v1720 = vand.u32 %v96, 4294901760
    %v1721 = vsub.f32 %v96, %v1720
    %v1722 = vand.u32 %v1721, 4294901760
    %1723 = vmatpush1.msra.mxu0 %v1722
    %v1724 = vand.u32 %v99, 4294901760
    %v1725 = vsub.f32 %v99, %v1724
    %v1726 = vand.u32 %v1725, 4294901760
    %1727 = vmatprep.subr.mxu0 %v1726
    %v1728 = vand.u32 %v98, 4294901760
    %v1729 = vsub.f32 %v98, %v1728
    %v1730 = vand.u32 %v1729, 4294901760
    %1731 = vmatpush1.msra.mxu0 %v1730
    %v1732 = vand.u32 %v101, 4294901760
    %v1733 = vsub.f32 %v101, %v1732
    %v1734 = vand.u32 %v1733, 4294901760
    %1735 = vmatprep.subr.mxu0 %v1734
    %v1736 = vand.u32 %v100, 4294901760
    %v1737 = vsub.f32 %v100, %v1736
    %v1738 = vand.u32 %v1737, 4294901760
    %1739 = vmatpush1.msra.mxu0 %v1738
    %v1740 = vand.u32 %v103, 4294901760
    %v1741 = vsub.f32 %v103, %v1740
    %v1742 = vand.u32 %v1741, 4294901760
    %1743 = vmatprep.subr.mxu0 %v1742
    %v1744 = vand.u32 %v102, 4294901760
    %v1745 = vsub.f32 %v102, %v1744
    %v1746 = vand.u32 %v1745, 4294901760
    %1747 = vmatpush1.msra.mxu0 %v1746
    %v1748 = vand.u32 %v105, 4294901760
    %v1749 = vsub.f32 %v105, %v1748
    %v1750 = vand.u32 %v1749, 4294901760
    %1751 = vmatprep.subr.mxu0 %v1750
    %v1752 = vand.u32 %v104, 4294901760
    %v1753 = vsub.f32 %v104, %v1752
    %v1754 = vand.u32 %v1753, 4294901760
    %1755 = vmatpush1.msra.mxu0 %v1754
    %v1756 = vand.u32 %v107, 4294901760
    %v1757 = vsub.f32 %v107, %v1756
    %v1758 = vand.u32 %v1757, 4294901760
    %1759 = vmatprep.subr.mxu0 %v1758
    %v1760 = vand.u32 %v106, 4294901760
    %v1761 = vsub.f32 %v106, %v1760
    %v1762 = vand.u32 %v1761, 4294901760
    %1763 = vmatpush1.msra.mxu0 %v1762
    %v1764 = vand.u32 %v109, 4294901760
    %v1765 = vsub.f32 %v109, %v1764
    %v1766 = vand.u32 %v1765, 4294901760
    %1767 = vmatprep.subr.mxu0 %v1766
    %v1768 = vand.u32 %v108, 4294901760
    %v1769 = vsub.f32 %v108, %v1768
    %v1770 = vand.u32 %v1769, 4294901760
    %1771 = vmatpush1.msra.mxu0 %v1770
    %v1772 = vand.u32 %v111, 4294901760
    %v1773 = vsub.f32 %v111, %v1772
    %v1774 = vand.u32 %v1773, 4294901760
    %1775 = vmatprep.subr.mxu0 %v1774
    %v1776 = vand.u32 %v110, 4294901760
    %v1777 = vsub.f32 %v110, %v1776
    %v1778 = vand.u32 %v1777, 4294901760
    %1779 = vmatpush1.msra.mxu0 %v1778
    %v1780 = vand.u32 %v113, 4294901760
    %v1781 = vsub.f32 %v113, %v1780
    %v1782 = vand.u32 %v1781, 4294901760
    %1783 = vmatprep.subr.mxu0 %v1782
    %v1784 = vand.u32 %v112, 4294901760
    %v1785 = vsub.f32 %v112, %v1784
    %v1786 = vand.u32 %v1785, 4294901760
    %1787 = vmatpush1.msra.mxu0 %v1786
    %v1788 = vand.u32 %v115, 4294901760
    %v1789 = vsub.f32 %v115, %v1788
    %v1790 = vand.u32 %v1789, 4294901760
    %1791 = vmatprep.subr.mxu0 %v1790
    %v1792 = vand.u32 %v114, 4294901760
    %v1793 = vsub.f32 %v114, %v1792
    %v1794 = vand.u32 %v1793, 4294901760
    %1795 = vmatpush1.msra.mxu0 %v1794
    %v1796 = vand.u32 %v117, 4294901760
    %v1797 = vsub.f32 %v117, %v1796
    %v1798 = vand.u32 %v1797, 4294901760
    %1799 = vmatprep.subr.mxu0 %v1798
    %v1800 = vand.u32 %v116, 4294901760
    %v1801 = vsub.f32 %v116, %v1800
    %v1802 = vand.u32 %v1801, 4294901760
    %1803 = vmatpush1.msra.mxu0 %v1802
    %v1804 = vand.u32 %v119, 4294901760
    %v1805 = vsub.f32 %v119, %v1804
    %v1806 = vand.u32 %v1805, 4294901760
    %1807 = vmatprep.subr.mxu0 %v1806
    %v1808 = vand.u32 %v118, 4294901760
    %v1809 = vsub.f32 %v118, %v1808
    %v1810 = vand.u32 %v1809, 4294901760
    %1811 = vmatpush1.msra.mxu0 %v1810
    %v1812 = vand.u32 %v121, 4294901760
    %v1813 = vsub.f32 %v121, %v1812
    %v1814 = vand.u32 %v1813, 4294901760
    %1815 = vmatprep.subr.mxu0 %v1814
    %v1816 = vand.u32 %v120, 4294901760
    %v1817 = vsub.f32 %v120, %v1816
    %v1818 = vand.u32 %v1817, 4294901760
    %1819 = vmatpush1.msra.mxu0 %v1818
    %v1820 = vand.u32 %v123, 4294901760
    %v1821 = vsub.f32 %v123, %v1820
    %v1822 = vand.u32 %v1821, 4294901760
    %1823 = vmatprep.subr.mxu0 %v1822
    %v1824 = vand.u32 %v122, 4294901760
    %v1825 = vsub.f32 %v122, %v1824
    %v1826 = vand.u32 %v1825, 4294901760
    %1827 = vmatpush1.msra.mxu0 %v1826
    %v1828 = vand.u32 %v125, 4294901760
    %v1829 = vsub.f32 %v125, %v1828
    %v1830 = vand.u32 %v1829, 4294901760
    %1831 = vmatprep.subr.mxu0 %v1830
    %v1832 = vand.u32 %v124, 4294901760
    %v1833 = vsub.f32 %v124, %v1832
    %v1834 = vand.u32 %v1833, 4294901760
    %1835 = vmatpush1.msra.mxu0 %v1834
    %v1836 = vand.u32 %v127, 4294901760
    %v1837 = vsub.f32 %v127, %v1836
    %v1838 = vand.u32 %v1837, 4294901760
    %1839 = vmatprep.subr.mxu0 %v1838
    %v1840 = vand.u32 %v126, 4294901760
    %v1841 = vsub.f32 %v126, %v1840
    %v1842 = vand.u32 %v1841, 4294901760
    %1843 = vmatpush1.msra.mxu0 %v1842
    %v1844 = vand.u32 %v129, 4294901760
    %v1845 = vsub.f32 %v129, %v1844
    %v1846 = vand.u32 %v1845, 4294901760
    %1847 = vmatprep.subr.mxu0 %v1846
    %v1848 = vand.u32 %v128, 4294901760
    %v1849 = vsub.f32 %v128, %v1848
    %v1850 = vand.u32 %v1849, 4294901760
    %1851 = vmatpush1.msra.mxu0 %v1850
    %v1852 = vand.u32 %v131, 4294901760
    %v1853 = vsub.f32 %v131, %v1852
    %v1854 = vand.u32 %v1853, 4294901760
    %1855 = vmatprep.subr.mxu0 %v1854
    %v1856 = vand.u32 %v130, 4294901760
    %v1857 = vsub.f32 %v130, %v1856
    %v1858 = vand.u32 %v1857, 4294901760
    %1859 = vmatpush1.msra.mxu0 %v1858
    %v1860 = vand.u32 %v133, 4294901760
    %v1861 = vsub.f32 %v133, %v1860
    %v1862 = vand.u32 %v1861, 4294901760
    %1863 = vmatprep.subr.mxu0 %v1862
    %v1864 = vand.u32 %v132, 4294901760
    %v1865 = vsub.f32 %v132, %v1864
    %v1866 = vand.u32 %v1865, 4294901760
    %1867 = vmatpush1.msra.mxu0 %v1866
    %v1868 = vand.u32 %v135, 4294901760
    %v1869 = vsub.f32 %v135, %v1868
    %v1870 = vand.u32 %v1869, 4294901760
    %1871 = vmatprep.subr.mxu0 %v1870
    %v1872 = vand.u32 %v134, 4294901760
    %v1873 = vsub.f32 %v134, %v1872
    %v1874 = vand.u32 %v1873, 4294901760
    %1875 = vmatpush1.msra.mxu0 %v1874
    %v1876 = vand.u32 %v137, 4294901760
    %v1877 = vsub.f32 %v137, %v1876
    %v1878 = vand.u32 %v1877, 4294901760
    %1879 = vmatprep.subr.mxu0 %v1878
    %v1880 = vand.u32 %v136, 4294901760
    %v1881 = vsub.f32 %v136, %v1880
    %v1882 = vand.u32 %v1881, 4294901760
    %1883 = vmatpush1.msra.mxu0 %v1882
    %v1884 = vand.u32 %v139, 4294901760
    %v1885 = vsub.f32 %v139, %v1884
    %v1886 = vand.u32 %v1885, 4294901760
    %1887 = vmatprep.subr.mxu0 %v1886
    %v1888 = vand.u32 %v138, 4294901760
    %v1889 = vsub.f32 %v138, %v1888
    %v1890 = vand.u32 %v1889, 4294901760
    %1891 = vmatpush1.msra.mxu0 %v1890
    %v1892 = vand.u32 %v141, 4294901760
    %v1893 = vsub.f32 %v141, %v1892
    %v1894 = vand.u32 %v1893, 4294901760
    %1895 = vmatprep.subr.mxu0 %v1894
    %v1896 = vand.u32 %v140, 4294901760
    %v1897 = vsub.f32 %v140, %v1896
    %v1898 = vand.u32 %v1897, 4294901760
    %1899 = vmatpush1.msra.mxu0 %v1898
    %v1900 = vand.u32 %v143, 4294901760
    %v1901 = vsub.f32 %v143, %v1900
    %v1902 = vand.u32 %v1901, 4294901760
    %1903 = vmatprep.subr.mxu0 %v1902
    %v1904 = vand.u32 %v142, 4294901760
    %v1905 = vsub.f32 %v142, %v1904
    %v1906 = vand.u32 %v1905, 4294901760
    %1907 = vmatpush1.msra.mxu0 %v1906
    %v1908 = vand.u32 %v145, 4294901760
    %v1909 = vsub.f32 %v145, %v1908
    %v1910 = vand.u32 %v1909, 4294901760
    %1911 = vmatprep.subr.mxu0 %v1910
    %v1912 = vand.u32 %v144, 4294901760
    %v1913 = vsub.f32 %v144, %v1912
    %v1914 = vand.u32 %v1913, 4294901760
    %1915 = vmatpush1.msra.mxu0 %v1914
    %v1916 = vand.u32 %v147, 4294901760
    %v1917 = vsub.f32 %v147, %v1916
    %v1918 = vand.u32 %v1917, 4294901760
    %1919 = vmatprep.subr.mxu0 %v1918
    %v1920 = vand.u32 %v146, 4294901760
    %v1921 = vsub.f32 %v146, %v1920
    %v1922 = vand.u32 %v1921, 4294901760
    %1923 = vmatpush1.msra.mxu0 %v1922
    %v1924 = vand.u32 %v149, 4294901760
    %v1925 = vsub.f32 %v149, %v1924
    %v1926 = vand.u32 %v1925, 4294901760
    %1927 = vmatprep.subr.mxu0 %v1926
    %v1928 = vand.u32 %v148, 4294901760
    %v1929 = vsub.f32 %v148, %v1928
    %v1930 = vand.u32 %v1929, 4294901760
    %1931 = vmatpush1.msra.mxu0 %v1930
    %v1932 = vand.u32 %v57, 4294901760
    %1933 = vmatprep.mubr.f32.mxu0 %v1932
    %v1934 = vand.u32 %v56, 4294901760
    %1935 = vmatmul.mubr.f32.gmra.mrb[0].mxu0 %v1934
    %v1936 = vpop.f32.mrb[0].mxu0
    %v1937 = vadd.f32 %v1504, %v1936
    %v1938 = vpop.f32.mrb[0].mxu0
    %v1939 = vadd.f32 %v1506, %v1938
    %v1940 = vand.u32 %v59, 4294901760
    %1941 = vmatprep.mubr.f32.mxu0 %v1940
    %v1942 = vand.u32 %v58, 4294901760
    %1943 = vmatmul.mubr.f32.gmra.mrb[0].mxu0 %v1942
    %v1944 = vpop.f32.mrb[0].mxu0
    %v1945 = vadd.f32 %v1516, %v1944
    %v1946 = vpop.f32.mrb[0].mxu0
    %v1947 = vadd.f32 %v1518, %v1946
    %v1948 = vand.u32 %v61, 4294901760
    %1949 = vmatprep.mubr.f32.mxu0 %v1948
    %v1950 = vand.u32 %v60, 4294901760
    %1951 = vmatmul.mubr.f32.gmra.mrb[0].mxu0 %v1950
    %v1952 = vpop.f32.mrb[0].mxu0
    %v1953 = vadd.f32 %v1528, %v1952
    %v1954 = vpop.f32.mrb[0].mxu0
    %v1955 = vadd.f32 %v1530, %v1954
    %v1956 = vand.u32 %v63, 4294901760
    %1957 = vmatprep.mubr.f32.mxu0 %v1956
    %v1958 = vand.u32 %v62, 4294901760
    %1959 = vmatmul.mubr.f32.gmra.mrb[0].mxu0 %v1958
    %v1960 = vpop.f32.mrb[0].mxu0
    %v1961 = vadd.f32 %v1540, %v1960
    %v1962 = vpop.f32.mrb[0].mxu0
    %v1963 = vadd.f32 %v1542, %v1962
    %v1964 = vand.u32 %v65, 4294901760
    %1965 = vmatprep.mubr.f32.mxu0 %v1964
    %v1966 = vand.u32 %v64, 4294901760
    %1967 = vmatmul.mubr.f32.gmra.mrb[0].mxu0 %v1966
    %v1968 = vpop.f32.mrb[0].mxu0
    %v1969 = vadd.f32 %v1552, %v1968
    %v1970 = vpop.f32.mrb[0].mxu0
    %v1971 = vadd.f32 %v1554, %v1970
    %v1972 = vand.u32 %v67, 4294901760
    %1973 = vmatprep.mubr.f32.mxu0 %v1972
    %v1974 = vand.u32 %v66, 4294901760
    %1975 = vmatmul.mubr.f32.gmra.mrb[0].mxu0 %v1974
    %v1976 = vpop.f32.mrb[0].mxu0
    %v1977 = vadd.f32 %v1564, %v1976
    %v1978 = vpop.f32.mrb[0].mxu0
    %v1979 = vadd.f32 %v1566, %v1978
    %v1980 = vand.u32 %v69, 4294901760
    %1981 = vmatprep.mubr.f32.mxu0 %v1980
    %v1982 = vand.u32 %v68, 4294901760
    %1983 = vmatmul.mubr.f32.gmra.mrb[0].mxu0 %v1982
    %v1984 = vpop.f32.mrb[0].mxu0
    %v1985 = vadd.f32 %v1576, %v1984
    %v1986 = vpop.f32.mrb[0].mxu0
    %v1987 = vadd.f32 %v1578, %v1986
    %v1988 = vand.u32 %v71, 4294901760
    %1989 = vmatprep.mubr.f32.mxu0 %v1988
    %v1990 = vand.u32 %v70, 4294901760
    %1991 = vmatmul.mubr.f32.gmra.mrb[0].mxu0 %v1990
    %v1992 = vpop.f32.mrb[0].mxu0
    %v1993 = vadd.f32 %v1588, %v1992
    %v1994 = vpop.f32.mrb[0].mxu0
    %v1995 = vadd.f32 %v1590, %v1994
    %v1996 = vand.u32 %v73, 4294901760
    %1997 = vmatprep.mubr.f32.mxu0 %v1996
    %v1998 = vand.u32 %v72, 4294901760
    %1999 = vmatmul.mubr.f32.gmra.mrb[0].mxu0 %v1998
    %v2000 = vpop.f32.mrb[0].mxu0
    %v2001 = vadd.f32 %v1600, %v2000
    %v2002 = vpop.f32.mrb[0].mxu0
    %v2003 = vadd.f32 %v1602, %v2002
    %v2004 = vand.u32 %v75, 4294901760
    %2005 = vmatprep.mubr.f32.mxu0 %v2004
    %v2006 = vand.u32 %v74, 4294901760
    %2007 = vmatmul.mubr.f32.gmra.mrb[0].mxu0 %v2006
    %v2008 = vpop.f32.mrb[0].mxu0
    %v2009 = vadd.f32 %v1612, %v2008
    %v2010 = vpop.f32.mrb[0].mxu0
    %v2011 = vadd.f32 %v1614, %v2010
    %v2012 = vand.u32 %v77, 4294901760
    %2013 = vmatprep.mubr.f32.mxu0 %v2012
    %v2014 = vand.u32 %v76, 4294901760
    %2015 = vmatmul.mubr.f32.gmra.mrb[0].mxu0 %v2014
    %v2016 = vpop.f32.mrb[0].mxu0
    %v2017 = vadd.f32 %v1624, %v2016
    %v2018 = vpop.f32.mrb[0].mxu0
    %v2019 = vadd.f32 %v1626, %v2018
    %v2020 = vand.u32 %v79, 4294901760
    %2021 = vmatprep.mubr.f32.mxu0 %v2020
    %v2022 = vand.u32 %v78, 4294901760
    %2023 = vmatmul.mubr.f32.gmra.mrb[0].mxu0 %v2022
    %v2024 = vpop.f32.mrb[0].mxu0
    %v2025 = vadd.f32 %v1636, %v2024
    %v2026 = vpop.f32.mrb[0].mxu0
    %v2027 = vadd.f32 %v1638, %v2026
    %v2028 = vand.u32 %v81, 4294901760
    %2029 = vmatprep.mubr.f32.mxu0 %v2028
    %v2030 = vand.u32 %v80, 4294901760
    %2031 = vmatmul.mubr.f32.gmra.mrb[0].mxu0 %v2030
    %v2032 = vpop.f32.mrb[0].mxu0
    %v2033 = vadd.f32 %v1648, %v2032
    %v2034 = vpop.f32.mrb[0].mxu0
    %v2035 = vadd.f32 %v1650, %v2034
    %v2036 = vand.u32 %v83, 4294901760
    %2037 = vmatprep.mubr.f32.mxu0 %v2036
    %v2038 = vand.u32 %v82, 4294901760
    %2039 = vmatmul.mubr.f32.gmra.mrb[0].mxu0 %v2038
    %v2040 = vpop.f32.mrb[0].mxu0
    %v2041 = vadd.f32 %v1660, %v2040
    %v2042 = vpop.f32.mrb[0].mxu0
    %v2043 = vadd.f32 %v1662, %v2042
    %v2044 = vand.u32 %v85, 4294901760
    %2045 = vmatprep.mubr.f32.mxu0 %v2044
    %v2046 = vand.u32 %v84, 4294901760
    %2047 = vmatmul.mubr.f32.gmra.mrb[0].mxu0 %v2046
    %v2048 = vpop.f32.mrb[0].mxu0
    %v2049 = vadd.f32 %v1672, %v2048
    %v2050 = vpop.f32.mrb[0].mxu0
    %v2051 = vadd.f32 %v1674, %v2050
    %2052 = vdwg.mxu0
    %v2053 = vand.u32 %v87, 4294901760
    %2054 = vmatprep.subr.mxu0 %v2053
    %v2055 = vand.u32 %v86, 4294901760
    %2056 = vmatpush1.msra.mxu0 %v2055
    %v2057 = vand.u32 %v89, 4294901760
    %2058 = vmatprep.subr.mxu0 %v2057
    %v2059 = vand.u32 %v88, 4294901760
    %2060 = vmatpush1.msra.mxu0 %v2059
    %v2061 = vand.u32 %v91, 4294901760
    %2062 = vmatprep.subr.mxu0 %v2061
    %v2063 = vand.u32 %v90, 4294901760
    %2064 = vmatpush1.msra.mxu0 %v2063
    %v2065 = vand.u32 %v93, 4294901760
    %2066 = vmatprep.subr.mxu0 %v2065
    %v2067 = vand.u32 %v92, 4294901760
    %2068 = vmatpush1.msra.mxu0 %v2067
    %v2069 = vand.u32 %v95, 4294901760
    %2070 = vmatprep.subr.mxu0 %v2069
    %v2071 = vand.u32 %v94, 4294901760
    %2072 = vmatpush1.msra.mxu0 %v2071
    %v2073 = vand.u32 %v97, 4294901760
    %2074 = vmatprep.subr.mxu0 %v2073
    %v2075 = vand.u32 %v96, 4294901760
    %2076 = vmatpush1.msra.mxu0 %v2075
    %v2077 = vand.u32 %v99, 4294901760
    %2078 = vmatprep.subr.mxu0 %v2077
    %v2079 = vand.u32 %v98, 4294901760
    %2080 = vmatpush1.msra.mxu0 %v2079
    %v2081 = vand.u32 %v101, 4294901760
    %2082 = vmatprep.subr.mxu0 %v2081
    %v2083 = vand.u32 %v100, 4294901760
    %2084 = vmatpush1.msra.mxu0 %v2083
    %v2085 = vand.u32 %v103, 4294901760
    %2086 = vmatprep.subr.mxu0 %v2085
    %v2087 = vand.u32 %v102, 4294901760
    %2088 = vmatpush1.msra.mxu0 %v2087
    %v2089 = vand.u32 %v105, 4294901760
    %2090 = vmatprep.subr.mxu0 %v2089
    %v2091 = vand.u32 %v104, 4294901760
    %2092 = vmatpush1.msra.mxu0 %v2091
    %v2093 = vand.u32 %v107, 4294901760
    %2094 = vmatprep.subr.mxu0 %v2093
    %v2095 = vand.u32 %v106, 4294901760
    %2096 = vmatpush1.msra.mxu0 %v2095
    %v2097 = vand.u32 %v109, 4294901760
    %2098 = vmatprep.subr.mxu0 %v2097
    %v2099 = vand.u32 %v108, 4294901760
    %2100 = vmatpush1.msra.mxu0 %v2099
    %v2101 = vand.u32 %v111, 4294901760
    %2102 = vmatprep.subr.mxu0 %v2101
    %v2103 = vand.u32 %v110, 4294901760
    %2104 = vmatpush1.msra.mxu0 %v2103
    %v2105 = vand.u32 %v113, 4294901760
    %2106 = vmatprep.subr.mxu0 %v2105
    %v2107 = vand.u32 %v112, 4294901760
    %2108 = vmatpush1.msra.mxu0 %v2107
    %v2109 = vand.u32 %v115, 4294901760
    %2110 = vmatprep.subr.mxu0 %v2109
    %v2111 = vand.u32 %v114, 4294901760
    %2112 = vmatpush1.msra.mxu0 %v2111
    %v2113 = vand.u32 %v117, 4294901760
    %2114 = vmatprep.subr.mxu0 %v2113
    %v2115 = vand.u32 %v116, 4294901760
    %2116 = vmatpush1.msra.mxu0 %v2115
    %v2117 = vand.u32 %v119, 4294901760
    %2118 = vmatprep.subr.mxu0 %v2117
    %v2119 = vand.u32 %v118, 4294901760
    %2120 = vmatpush1.msra.mxu0 %v2119
    %v2121 = vand.u32 %v121, 4294901760
    %2122 = vmatprep.subr.mxu0 %v2121
    %v2123 = vand.u32 %v120, 4294901760
    %2124 = vmatpush1.msra.mxu0 %v2123
    %v2125 = vand.u32 %v123, 4294901760
    %2126 = vmatprep.subr.mxu0 %v2125
    %v2127 = vand.u32 %v122, 4294901760
    %2128 = vmatpush1.msra.mxu0 %v2127
    %v2129 = vand.u32 %v125, 4294901760
    %2130 = vmatprep.subr.mxu0 %v2129
    %v2131 = vand.u32 %v124, 4294901760
    %2132 = vmatpush1.msra.mxu0 %v2131
    %v2133 = vand.u32 %v127, 4294901760
    %2134 = vmatprep.subr.mxu0 %v2133
    %v2135 = vand.u32 %v126, 4294901760
    %2136 = vmatpush1.msra.mxu0 %v2135
    %v2137 = vand.u32 %v129, 4294901760
    %2138 = vmatprep.subr.mxu0 %v2137
    %v2139 = vand.u32 %v128, 4294901760
    %2140 = vmatpush1.msra.mxu0 %v2139
    %v2141 = vand.u32 %v131, 4294901760
    %2142 = vmatprep.subr.mxu0 %v2141
    %v2143 = vand.u32 %v130, 4294901760
    %2144 = vmatpush1.msra.mxu0 %v2143
    %v2145 = vand.u32 %v133, 4294901760
    %2146 = vmatprep.subr.mxu0 %v2145
    %v2147 = vand.u32 %v132, 4294901760
    %2148 = vmatpush1.msra.mxu0 %v2147
    %v2149 = vand.u32 %v135, 4294901760
    %2150 = vmatprep.subr.mxu0 %v2149
    %v2151 = vand.u32 %v134, 4294901760
    %2152 = vmatpush1.msra.mxu0 %v2151
    %v2153 = vand.u32 %v137, 4294901760
    %2154 = vmatprep.subr.mxu0 %v2153
    %v2155 = vand.u32 %v136, 4294901760
    %2156 = vmatpush1.msra.mxu0 %v2155
    %v2157 = vand.u32 %v139, 4294901760
    %2158 = vmatprep.subr.mxu0 %v2157
    %v2159 = vand.u32 %v138, 4294901760
    %2160 = vmatpush1.msra.mxu0 %v2159
    %v2161 = vand.u32 %v141, 4294901760
    %2162 = vmatprep.subr.mxu0 %v2161
    %v2163 = vand.u32 %v140, 4294901760
    %2164 = vmatpush1.msra.mxu0 %v2163
    %v2165 = vand.u32 %v143, 4294901760
    %2166 = vmatprep.subr.mxu0 %v2165
    %v2167 = vand.u32 %v142, 4294901760
    %2168 = vmatpush1.msra.mxu0 %v2167
    %v2169 = vand.u32 %v145, 4294901760
    %2170 = vmatprep.subr.mxu0 %v2169
    %v2171 = vand.u32 %v144, 4294901760
    %2172 = vmatpush1.msra.mxu0 %v2171
    %v2173 = vand.u32 %v147, 4294901760
    %2174 = vmatprep.subr.mxu0 %v2173
    %v2175 = vand.u32 %v146, 4294901760
    %2176 = vmatpush1.msra.mxu0 %v2175
    %v2177 = vand.u32 %v149, 4294901760
    %2178 = vmatprep.subr.mxu0 %v2177
    %v2179 = vand.u32 %v148, 4294901760
    %2180 = vmatpush1.msra.mxu0 %v2179
    %v2181 = vand.u32 %v57, 4294901760
    %2182 = vmatprep.mubr.f32.mxu0 %v2181
    %v2183 = vand.u32 %v56, 4294901760
    %2184 = vmatmul.mubr.f32.gmra.mrb[0].mxu0 %v2183
    %v2185 = vpop.f32.mrb[0].mxu0
    %v2186 = vadd.f32 %v1937, %v2185
    %v2187 = vpop.f32.mrb[0].mxu0
    %v2188 = vadd.f32 %v1939, %v2187
    %v2189 = vand.u32 %v59, 4294901760
    %2190 = vmatprep.mubr.f32.mxu0 %v2189
    %v2191 = vand.u32 %v58, 4294901760
    %2192 = vmatmul.mubr.f32.gmra.mrb[0].mxu0 %v2191
    %v2193 = vpop.f32.mrb[0].mxu0
    %v2194 = vadd.f32 %v1945, %v2193
    %v2195 = vpop.f32.mrb[0].mxu0
    %v2196 = vadd.f32 %v1947, %v2195
    %v2197 = vand.u32 %v61, 4294901760
    %2198 = vmatprep.mubr.f32.mxu0 %v2197
    %v2199 = vand.u32 %v60, 4294901760
    %2200 = vmatmul.mubr.f32.gmra.mrb[0].mxu0 %v2199
    %v2201 = vpop.f32.mrb[0].mxu0
    %v2202 = vadd.f32 %v1953, %v2201
    %v2203 = vpop.f32.mrb[0].mxu0
    %v2204 = vadd.f32 %v1955, %v2203
    %v2205 = vand.u32 %v63, 4294901760
    %2206 = vmatprep.mubr.f32.mxu0 %v2205
    %v2207 = vand.u32 %v62, 4294901760
    %2208 = vmatmul.mubr.f32.gmra.mrb[0].mxu0 %v2207
    %v2209 = vpop.f32.mrb[0].mxu0
    %v2210 = vadd.f32 %v1961, %v2209
    %v2211 = vpop.f32.mrb[0].mxu0
    %v2212 = vadd.f32 %v1963, %v2211
    %v2213 = vand.u32 %v65, 4294901760
    %2214 = vmatprep.mubr.f32.mxu0 %v2213
    %v2215 = vand.u32 %v64, 4294901760
    %2216 = vmatmul.mubr.f32.gmra.mrb[0].mxu0 %v2215
    %v2217 = vpop.f32.mrb[0].mxu0
    %v2218 = vadd.f32 %v1969, %v2217
    %v2219 = vpop.f32.mrb[0].mxu0
    %v2220 = vadd.f32 %v1971, %v2219
    %v2221 = vand.u32 %v67, 4294901760
    %2222 = vmatprep.mubr.f32.mxu0 %v2221
    %v2223 = vand.u32 %v66, 4294901760
    %2224 = vmatmul.mubr.f32.gmra.mrb[0].mxu0 %v2223
    %v2225 = vpop.f32.mrb[0].mxu0
    %v2226 = vadd.f32 %v1977, %v2225
    %v2227 = vpop.f32.mrb[0].mxu0
    %v2228 = vadd.f32 %v1979, %v2227
    %v2229 = vand.u32 %v69, 4294901760
    %2230 = vmatprep.mubr.f32.mxu0 %v2229
    %v2231 = vand.u32 %v68, 4294901760
    %2232 = vmatmul.mubr.f32.gmra.mrb[0].mxu0 %v2231
    %v2233 = vpop.f32.mrb[0].mxu0
    %v2234 = vadd.f32 %v1985, %v2233
    %v2235 = vpop.f32.mrb[0].mxu0
    %v2236 = vadd.f32 %v1987, %v2235
    %v2237 = vand.u32 %v71, 4294901760
    %2238 = vmatprep.mubr.f32.mxu0 %v2237
    %v2239 = vand.u32 %v70, 4294901760
    %2240 = vmatmul.mubr.f32.gmra.mrb[0].mxu0 %v2239
    %v2241 = vpop.f32.mrb[0].mxu0
    %v2242 = vadd.f32 %v1993, %v2241
    %v2243 = vpop.f32.mrb[0].mxu0
    %v2244 = vadd.f32 %v1995, %v2243
    %v2245 = vand.u32 %v73, 4294901760
    %2246 = vmatprep.mubr.f32.mxu0 %v2245
    %v2247 = vand.u32 %v72, 4294901760
    %2248 = vmatmul.mubr.f32.gmra.mrb[0].mxu0 %v2247
    %v2249 = vpop.f32.mrb[0].mxu0
    %v2250 = vadd.f32 %v2001, %v2249
    %v2251 = vpop.f32.mrb[0].mxu0
    %v2252 = vadd.f32 %v2003, %v2251
    %v2253 = vand.u32 %v75, 4294901760
    %2254 = vmatprep.mubr.f32.mxu0 %v2253
    %v2255 = vand.u32 %v74, 4294901760
    %2256 = vmatmul.mubr.f32.gmra.mrb[0].mxu0 %v2255
    %v2257 = vpop.f32.mrb[0].mxu0
    %v2258 = vadd.f32 %v2009, %v2257
    %v2259 = vpop.f32.mrb[0].mxu0
    %v2260 = vadd.f32 %v2011, %v2259
    %v2261 = vand.u32 %v77, 4294901760
    %2262 = vmatprep.mubr.f32.mxu0 %v2261
    %v2263 = vand.u32 %v76, 4294901760
    %2264 = vmatmul.mubr.f32.gmra.mrb[0].mxu0 %v2263
    %v2265 = vpop.f32.mrb[0].mxu0
    %v2266 = vadd.f32 %v2017, %v2265
    %v2267 = vpop.f32.mrb[0].mxu0
    %v2268 = vadd.f32 %v2019, %v2267
    %v2269 = vand.u32 %v79, 4294901760
    %2270 = vmatprep.mubr.f32.mxu0 %v2269
    %v2271 = vand.u32 %v78, 4294901760
    %2272 = vmatmul.mubr.f32.gmra.mrb[0].mxu0 %v2271
    %v2273 = vpop.f32.mrb[0].mxu0
    %v2274 = vadd.f32 %v2025, %v2273
    %v2275 = vpop.f32.mrb[0].mxu0
    %v2276 = vadd.f32 %v2027, %v2275
    %v2277 = vand.u32 %v81, 4294901760
    %2278 = vmatprep.mubr.f32.mxu0 %v2277
    %v2279 = vand.u32 %v80, 4294901760
    %2280 = vmatmul.mubr.f32.gmra.mrb[0].mxu0 %v2279
    %v2281 = vpop.f32.mrb[0].mxu0
    %v2282 = vadd.f32 %v2033, %v2281
    %v2283 = vpop.f32.mrb[0].mxu0
    %v2284 = vadd.f32 %v2035, %v2283
    %v2285 = vand.u32 %v83, 4294901760
    %2286 = vmatprep.mubr.f32.mxu0 %v2285
    %v2287 = vand.u32 %v82, 4294901760
    %2288 = vmatmul.mubr.f32.gmra.mrb[0].mxu0 %v2287
    %v2289 = vpop.f32.mrb[0].mxu0
    %v2290 = vadd.f32 %v2041, %v2289
    %v2291 = vpop.f32.mrb[0].mxu0
    %v2292 = vadd.f32 %v2043, %v2291
    %v2293 = vand.u32 %v85, 4294901760
    %2294 = vmatprep.mubr.f32.mxu0 %v2293
    %v2295 = vand.u32 %v84, 4294901760
    %2296 = vmatmul.mubr.f32.gmra.mrb[0].mxu0 %v2295
    %v2297 = vpop.f32.mrb[0].mxu0
    %v2298 = vadd.f32 %v2049, %v2297
    %v2299 = vpop.f32.mrb[0].mxu0
    %v2300 = vadd.f32 %v2051, %v2299
    %2301 = vdwg.mxu0
    %v2302 = vld [vmem:[#allocation2] sm:$0xff]
    %v2303 = vld [vmem:[#allocation2 + $0x8] sm:$0xff]
    %v2304 = vld [vmem:[#allocation2 + $0x10] sm:$0xff]
    %v2305 = vld [vmem:[#allocation2 + $0x18] sm:$0xff]
    %v2306 = vld [vmem:[#allocation2 + $0x20] sm:$0xff]
    %v2307 = vld [vmem:[#allocation2 + $0x28] sm:$0xff]
    %v2308 = vld [vmem:[#allocation2 + $0x30] sm:$0xff]
    %v2309 = vld [vmem:[#allocation2 + $0x38] sm:$0xff]
    %v2310 = vld [vmem:[#allocation2 + $0x40] sm:$0xff]
    %v2311 = vld [vmem:[#allocation2 + $0x48] sm:$0xff]
    %v2312 = vld [vmem:[#allocation2 + $0x50] sm:$0xff]
    %v2313 = vld [vmem:[#allocation2 + $0x58] sm:$0xff]
    %v2314 = vld [vmem:[#allocation2 + $0x60] sm:$0xff]
    %v2315 = vld [vmem:[#allocation2 + $0x68] sm:$0xff]
    %v2316 = vld [vmem:[#allocation2 + $0x70] sm:$0xff]
    %v2317 = vld [vmem:[#allocation2 + $0x78] sm:$0xff]
    %v2318 = vld [vmem:[#allocation2 + $0x80] sm:$0xff]
    %v2319 = vld [vmem:[#allocation2 + $0x88] sm:$0xff]
    %v2320 = vld [vmem:[#allocation2 + $0x90] sm:$0xff]
    %v2321 = vld [vmem:[#allocation2 + $0x98] sm:$0xff]
    %v2322 = vld [vmem:[#allocation2 + $0xa0] sm:$0xff]
    %v2323 = vld [vmem:[#allocation2 + $0xa8] sm:$0xff]
    %v2324 = vld [vmem:[#allocation2 + $0xb0] sm:$0xff]
    %v2325 = vld [vmem:[#allocation2 + $0xb8] sm:$0xff]
    %v2326 = vld [vmem:[#allocation2 + $0xc0] sm:$0xff]
    %v2327 = vld [vmem:[#allocation2 + $0xc8] sm:$0xff]
    %v2328 = vld [vmem:[#allocation2 + $0xd0] sm:$0xff]
    %v2329 = vld [vmem:[#allocation2 + $0xd8] sm:$0xff]
    %v2330 = vld [vmem:[#allocation2 + $0xe0] sm:$0xff]
    %v2331 = vld [vmem:[#allocation2 + $0xe8] sm:$0xff]
    %v2332 = vadd.f32 %v2302, %v2186
    %v2333 = vadd.f32 %v2303, %v2188
    %v2334 = vadd.f32 %v2304, %v2194
    %v2335 = vadd.f32 %v2305, %v2196
    %v2336 = vadd.f32 %v2306, %v2202
    %v2337 = vadd.f32 %v2307, %v2204
    %v2338 = vadd.f32 %v2308, %v2210
    %v2339 = vadd.f32 %v2309, %v2212
    %v2340 = vadd.f32 %v2310, %v2218
    %v2341 = vadd.f32 %v2311, %v2220
    %v2342 = vadd.f32 %v2312, %v2226
    %v2343 = vadd.f32 %v2313, %v2228
    %v2344 = vadd.f32 %v2314, %v2234
    %v2345 = vadd.f32 %v2315, %v2236
    %v2346 = vadd.f32 %v2316, %v2242
    %v2347 = vadd.f32 %v2317, %v2244
    %v2348 = vadd.f32 %v2318, %v2250
    %v2349 = vadd.f32 %v2319, %v2252
    %v2350 = vadd.f32 %v2320, %v2258
    %v2351 = vadd.f32 %v2321, %v2260
    %v2352 = vadd.f32 %v2322, %v2266
    %v2353 = vadd.f32 %v2323, %v2268
    %v2354 = vadd.f32 %v2324, %v2274
    %v2355 = vadd.f32 %v2325, %v2276
    %v2356 = vadd.f32 %v2326, %v2282
    %v2357 = vadd.f32 %v2327, %v2284
    %v2358 = vadd.f32 %v2328, %v2290
    %v2359 = vadd.f32 %v2329, %v2292
    %v2360 = vadd.f32 %v2330, %v2298
    %v2361 = vadd.f32 %v2331, %v2300
    %v2362 = vadd.f32 %v2332, 1.0
    %v2363 = vadd.f32 %v2333, 1.0
    %v2364 = vadd.f32 %v2334, 1.0
    %v2365 = vadd.f32 %v2335, 1.0
    %v2366 = vadd.f32 %v2336, 1.0
    %v2367 = vadd.f32 %v2337, 1.0
    %v2368 = vadd.f32 %v2338, 1.0
    %v2369 = vadd.f32 %v2339, 1.0
    %v2370 = vadd.f32 %v2340, 1.0
    %v2371 = vadd.f32 %v2341, 1.0
    %v2372 = vadd.f32 %v2342, 1.0
    %v2373 = vadd.f32 %v2343, 1.0
    %v2374 = vadd.f32 %v2344, 1.0
    %v2375 = vadd.f32 %v2345, 1.0
    %v2376 = vadd.f32 %v2346, 1.0
    %v2377 = vadd.f32 %v2347, 1.0
    %v2378 = vadd.f32 %v2348, 1.0
    %v2379 = vadd.f32 %v2349, 1.0
    %v2380 = vadd.f32 %v2350, 1.0
    %v2381 = vadd.f32 %v2351, 1.0
    %v2382 = vadd.f32 %v2352, 1.0
    %v2383 = vadd.f32 %v2353, 1.0
    %v2384 = vadd.f32 %v2354, 1.0
    %v2385 = vadd.f32 %v2355, 1.0
    %v2386 = vadd.f32 %v2356, 1.0
    %v2387 = vadd.f32 %v2357, 1.0
    %v2388 = vadd.f32 %v2358, 1.0
    %v2389 = vadd.f32 %v2359, 1.0
    %v2390 = vadd.f32 %v2360, 1.0
    %v2391 = vadd.f32 %v2361, 1.0
    %2392 = vst [vmem:[#allocation8] sm:$0xff] %v2362
    %2393 = vst [vmem:[#allocation8 + $0x8] sm:$0xff] %v2363
    %2394 = vst [vmem:[#allocation8 + $0x10] sm:$0xff] %v2364
    %2395 = vst [vmem:[#allocation8 + $0x18] sm:$0xff] %v2365
    %2396 = vst [vmem:[#allocation8 + $0x20] sm:$0xff] %v2366
    %2397 = vst [vmem:[#allocation8 + $0x28] sm:$0xff] %v2367
    %2398 = vst [vmem:[#allocation8 + $0x30] sm:$0xff] %v2368
    %2399 = vst [vmem:[#allocation8 + $0x38] sm:$0xff] %v2369
    %2400 = vst [vmem:[#allocation8 + $0x40] sm:$0xff] %v2370
    %2401 = vst [vmem:[#allocation8 + $0x48] sm:$0xff] %v2371
    %2402 = vst [vmem:[#allocation8 + $0x50] sm:$0xff] %v2372
    %2403 = vst [vmem:[#allocation8 + $0x58] sm:$0xff] %v2373
    %2404 = vst [vmem:[#allocation8 + $0x60] sm:$0xff] %v2374
    %2405 = vst [vmem:[#allocation8 + $0x68] sm:$0xff] %v2375
    %2406 = vst [vmem:[#allocation8 + $0x70] sm:$0xff] %v2376
    %2407 = vst [vmem:[#allocation8 + $0x78] sm:$0xff] %v2377
    %2408 = vst [vmem:[#allocation8 + $0x80] sm:$0xff] %v2378
    %2409 = vst [vmem:[#allocation8 + $0x88] sm:$0xff] %v2379
    %2410 = vst [vmem:[#allocation8 + $0x90] sm:$0xff] %v2380
    %2411 = vst [vmem:[#allocation8 + $0x98] sm:$0xff] %v2381
    %2412 = vst [vmem:[#allocation8 + $0xa0] sm:$0xff] %v2382
    %2413 = vst [vmem:[#allocation8 + $0xa8] sm:$0xff] %v2383
    %2414 = vst [vmem:[#allocation8 + $0xb0] sm:$0xff] %v2384
    %2415 = vst [vmem:[#allocation8 + $0xb8] sm:$0xff] %v2385
    %2416 = vst [vmem:[#allocation8 + $0xc0] sm:$0xff] %v2386
    %2417 = vst [vmem:[#allocation8 + $0xc8] sm:$0xff] %v2387
    %2418 = vst [vmem:[#allocation8 + $0xd0] sm:$0xff] %v2388
    %2419 = vst [vmem:[#allocation8 + $0xd8] sm:$0xff] %v2389
    %2420 = vst [vmem:[#allocation8 + $0xe0] sm:$0xff] %v2390
    %2421 = vst [vmem:[#allocation8 + $0xe8] sm:$0xff] %v2391
    // Predicated region
    $region26: #{tpu_custom_call.1} parent=1 // pred_check
      _
    $region27: #{tpu_custom_call.1} parent=1 // pred_check_branch
      %2423 = sbr.rel (0) target = $region29
    $region28: #{tpu_custom_call.1} parent=1 // pred_region
      %s2425 = ssub.s32 3840, 3840
      %2426 = vsyncadd [#allocation4], %s2425
      %s2427 = sshll.u32 [#allocation8], 4
      %s2428 = int_to_ptr.vmem [resolvable:$true] %s2427
      %2433 = dma.vmem_to_hbm [thread:$0]  %s2428, 3840, %s3, [#allocation4], 256, 256, 16
    $region29: #{tpu_custom_call.1} parent=1 // pred_fallthru
      _
    // Predicated region
    $region30: #{tpu_custom_call.1} parent=1 // pred_check
      _
    $region31: #{tpu_custom_call.1} parent=1 // pred_check_branch
      %2435 = sbr.rel (0) target = $region33
    $region32: #{tpu_custom_call.1} parent=1 // pred_region
      %2436 = dma.done [#allocation4], 3840
    $region33: #{tpu_custom_call.1} parent=1 // pred_fallthru
      _
    %2437 = vsyncpa [#allocation3], 1
    %2438 = vsyncpa [#allocation6], 1
    %2439 = vsyncpa [#allocation4], 1

</llo_original>
